<compile_context>
chip_gen: v7x
topology: tpu7x:2x2x1
jax: 0.10.0
libtpu: 0.0.40
codegen_flags: <defaults>
</compile_context>

<pallas_src>
import functools

import jax
import jax.numpy as jnp
import numpy as np
from jax.experimental import pallas as pl
from jax.experimental.pallas import tpu as pltpu

GEM_EPS = 1e-6
BN_EPS = 1e-5
LANE = 128


def _round_up(n, m):
    return ((n + m - 1) // m) * m


# ---------------------------------------------------------------------------
# Fused kernel: backbone(1x1 conv) + GeM + ReID head + attribute heads
# ---------------------------------------------------------------------------
def fused_kernel(x_ref, wc_ref, bc_ref, w1a_ref, b1a_ref, w2_ref, b2_ref,
                 reid_ref, attr_ref, acc_ref, *, total_hw, gem_p, embed_pad):
    h = pl.program_id(1)  # spatial (reduction) grid axis

    @pl.when(h == 0)
    def _init():
        acc_ref[...] = jnp.zeros_like(acc_ref)

    tb, thw, cin = x_ref.shape
    d = wc_ref.shape[1]

    # Synthetic backbone (1x1 conv over channels), batch flattened into the M dim.
    # x stays f32 in HBM; cast to bf16 here (in VMEM) instead of a host HBM pass.
    x2 = x_ref[...].astype(jnp.bfloat16).reshape(tb * thw, cin)
    feat = jnp.dot(x2, wc_ref[...],
                   preferred_element_type=jnp.float32) + bc_ref[...]      # f32 (tb*thw, D)

    # GeM accumulation: clamp(min=eps) ** p, summed over this spatial tile.
    feat = jnp.maximum(feat, GEM_EPS)
    p_int = int(round(gem_p))
    if abs(gem_p - p_int) < 1e-9 and 1 <= p_int <= 6:
        # Integer p (default 3.0): p-1 VPU multiplies, no EUP transcendentals.
        powed = feat
        for _ in range(p_int - 1):
            powed = powed * feat
    else:
        # Non-integer p fallback (still a static trace-time choice).
        powed = jnp.exp(gem_p * jnp.log(feat))

    acc_ref[...] += jnp.sum(powed.reshape(tb, thw, d), axis=1)            # (tb, D)

    @pl.when(h == pl.num_programs(1) - 1)
    def _finalize():
        # GeM finalize: divide by the TRUE H*W, pow(1/p) (tiny tb*D EUP cost, once).
        pooled = acc_ref[...] * (1.0 / float(total_hw))
        shared = jnp.exp(jnp.log(pooled) * (1.0 / gem_p))                 # (tb, D) f32
        shared_mm = shared.astype(w1a_ref.dtype)                          # bf16 for MXU

        # Single fused projection: [ReID fc (BN folded) | all attribute heads].
        proj = jnp.dot(shared_mm, w1a_ref[...],
                       preferred_element_type=jnp.float32) + b1a_ref[...] # (tb, Epad+NApad)
        e = proj[:, :embed_pad]                    # padded embed cols are exactly zero
        attr_ref[...] = proj[:, embed_pad:]

        # F.normalize(x, p=2, dim=1): x / max(||x||, 1e-12) == x * rsqrt(max(||x||^2, 1e-24))
        inv_norm = jax.lax.rsqrt(
            jnp.maximum(jnp.sum(e * e, axis=1, keepdims=True), 1e-24))
        e = (e * inv_norm).astype(w2_ref.dtype)
        reid_ref[...] = jnp.dot(e, w2_ref[...],
                                preferred_element_type=jnp.float32) + b2_ref[...]


# ---------------------------------------------------------------------------
# Tiling heuristics (generation-aware)
# ---------------------------------------------------------------------------
def _vmem_limits():
    """(tile budget bytes, vmem_limit_bytes): generous on 128-MiB parts (v5e/v6e),
    conservative on 64-MiB v7x (also the fallback when the query fails)."""
    cap = None
    try:
        cap = getattr(pltpu.get_tpu_info(), "vmem_capacity_bytes", None)
    except Exception:
        cap = None
    if cap is not None and cap >= (100 << 20):       # v5e / v6e: 128 MiB VMEM
        return 24 << 20, 96 << 20
    return 10 << 20, 32 << 20                        # v7x (64 MiB) / unknown


def _pick_tb(batch, cap=32):
    """Batch tile: multiple of 8 (sublane-valid output blocks), as large as possible
    while keeping grid[0] >= 2 so v7x's two TensorCores both get work."""
    cands = [t for t in range(8, min(batch, cap) + 1, 8) if batch % t == 0]
    if cands:
        two_step = [t for t in cands if batch // t >= 2]
        return max(two_step) if two_step else max(cands)
    return batch     # small / odd batch: one full-batch block (tb == B is spec-legal)


def _pick_tile_hw(hw, tb, feat_dim, cin, budget_bytes):
    """Largest HW tile (multiple of 8, dividing hw) fitting the VMEM budget.
    Cost model: double-buffered f32 x tile + ~one live f32 feat intermediate
    (feat/powed fuse elementwise in the compiler)."""
    def cost(t):
        return 2 * tb * t * cin * 4 + tb * t * feat_dim * 4
    if hw % 8 != 0:
        # TODO(synk): non-8-divisible HW falls back to one full-axis block; for very
        # large inputs this can exceed the VMEM limit (needs a masked-tiling path).
        return hw
    best = 8
    t = 8
    while t <= hw:
        if hw % t == 0 and cost(t) <= budget_bytes:
            best = t
        t += 8
    return best


# ---------------------------------------------------------------------------
# pallas_call wrapper
# ---------------------------------------------------------------------------
def fused_forward(x_flat, prep, *, tile_hw=None):
    """x_flat: (B, HW, Cin) float32.  Returns lane-padded (reid, attrs) f32."""
    B, HW, Cin = x_flat.shape
    D = prep["w_conv"].shape[1]
    NCp = prep["w2"].shape[1]
    NAp = prep["w1a"].shape[1] - prep["embed_pad"]

    budget, vmem_limit = _vmem_limits()
    tb = _pick_tb(B)
    if tile_hw is None:
        tile_hw = _pick_tile_hw(HW, tb, D, Cin, budget)
    assert HW % tile_hw == 0 and B % tb == 0
    grid = (B // tb, HW // tile_hw)

    def _full_spec(arr):
        nd = arr.ndim
        return pl.BlockSpec(arr.shape, lambda b, h, _nd=nd: (0,) * _nd)

    kernel = functools.partial(fused_kernel, total_hw=HW,
                               gem_p=prep["gem_p"], embed_pad=prep["embed_pad"])

    # NOTE: the constant-index weight blocks could be single-buffered
    # (pipeline_mode=pl.Buffered(1)) to reclaim VMEM on v7x with real EfficientNet dims;
    # left default here since the toy weights are tiny.
    return pl.pallas_call(
        kernel,
        out_shape=(jax.ShapeDtypeStruct((B, NCp), jnp.float32),
                   jax.ShapeDtypeStruct((B, NAp), jnp.float32)),
        grid_spec=pltpu.PrefetchScalarGridSpec(
            num_scalar_prefetch=0,
            grid=grid,
            in_specs=[
                pl.BlockSpec((tb, tile_hw, Cin), lambda b, h: (b, h, 0)),   # x (f32)
                _full_spec(prep["w_conv"]),                                 # conv weight (bf16)
                _full_spec(prep["b_conv"]),                                 # conv bias (f32)
                _full_spec(prep["w1a"]), _full_spec(prep["b1a"]),           # fused [reid fc | attrs]
                _full_spec(prep["w2"]), _full_spec(prep["b2"]),             # reid classifier
            ],
            out_specs=(
                pl.BlockSpec((tb, NCp), lambda b, h: (b, 0)),
                pl.BlockSpec((tb, NAp), lambda b, h: (b, 0)),
            ),
            scratch_shapes=[pltpu.VMEM((tb, D), jnp.float32)],              # sum(feat**p)
        ),
        compiler_params=pltpu.CompilerParams(
            dimension_semantics=("parallel", "arbitrary"),
            vmem_limit_bytes=vmem_limit,
        ),
    )(x_flat, prep["w_conv"], prep["b_conv"],
      prep["w1a"], prep["b1a"], prep["w2"], prep["b2"])


# ---------------------------------------------------------------------------
# Full model forward
# ---------------------------------------------------------------------------
def multi_task_reid_forward(x, prep, *, data_format="NCHW", tile_hw=None):
    if data_format == "NCHW":
        B, Cin, H, W = x.shape
        # One XLA relayout; pass NHWC (data_format="NHWC") to avoid it entirely.
        x = jnp.transpose(x, (0, 2, 3, 1))
    else:
        B, H, W, Cin = x.shape
    x_flat = x.reshape(B, H * W, Cin)          # stays f32; bf16 cast happens in-kernel

    reid_pad, attr_pad = fused_forward(x_flat, prep, tile_hw=tile_hw)
    reid = reid_pad[:, :prep["num_classes"]]
    attrs = attr_pad[:, :prep["n_attr"]]

    # Split the fused attribute output (B, 123):
    # 7 binary heads (1 each), shoes_color(3), 8 x upper_color(8), 7 x lower_color(7)
    outputs = {"reid": reid}
    off = 0
    for name in ["gender", "top", "boots", "hat", "backpack", "bag", "handbag"]:
        outputs[name] = attrs[:, off:off + 1]
        off += 1
    outputs["shoes_color"] = attrs[:, off:off + 3]
    off += 3
    outputs["upper_colors"] = []
    for _ in range(8):
        outputs["upper_colors"].append(attrs[:, off:off + 8])
        off += 8
    outputs["lower_colors"] = []
    for _ in range(7):
        outputs["lower_colors"].append(attrs[:, off:off + 7])
        off += 7
    return outputs


# ---------------------------------------------------------------------------
# Parameters: raw (PyTorch-style) + one-time host preparation (BN fold, pad, cast)
# ---------------------------------------------------------------------------
def make_params(key, cin, feat_dim, embed_dim, num_classes):
    ks = jax.random.split(key, 12)
    n_attr = 7 * 1 + 3 + 8 * 8 + 7 * 7  # 123
    return {
        "w_conv": jax.random.normal(ks[0], (cin, feat_dim), jnp.float32) * 0.1,
        "b_conv": jax.random.normal(ks[1], (1, feat_dim), jnp.float32) * 0.01,
        "gem_p": 3.0,
        "reid_w1": jax.random.normal(ks[2], (feat_dim, embed_dim), jnp.float32) * 0.05,
        "reid_b1": jax.random.normal(ks[3], (1, embed_dim), jnp.float32) * 0.01,
        "bn_gamma": 1.0 + 0.1 * jax.random.normal(ks[4], (1, embed_dim), jnp.float32),
        "bn_beta": 0.05 * jax.random.normal(ks[5], (1, embed_dim), jnp.float32),
        "bn_rmean": 0.05 * jax.random.normal(ks[6], (1, embed_dim), jnp.float32),
        "bn_rvar": 1.0 + 0.1 * jax.random.uniform(ks[7], (1, embed_dim), jnp.float32),
        "reid_w2": jax.random.normal(ks[8], (embed_dim, num_classes), jnp.float32) * 0.05,
        "reid_b2": jax.random.normal(ks[9], (1, num_classes), jnp.float32) * 0.01,
        "attr_w": jax.random.normal(ks[10], (feat_dim, n_attr), jnp.float32) * 0.05,
        "attr_b": jax.random.normal(ks[11], (1, n_attr), jnp.float32) * 0.01,
    }


def prepare_params(raw):
    """One-time host precompute: fold eval-mode BN into the ReID fc, pad narrow head
    outputs to 128 lanes, fuse [reid_fc | attr] weights, cast MXU operands to bf16."""
    scale = raw["bn_gamma"] * jax.lax.rsqrt(raw["bn_rvar"] + BN_EPS)          # (1, E)
    w1f = raw["reid_w1"] * scale                                              # (D, E)
    b1f = (raw["reid_b1"] - raw["bn_rmean"]) * scale + raw["bn_beta"]         # (1, E)

    E = w1f.shape[1]
    NC = raw["reid_w2"].shape[1]
    NA = raw["attr_w"].shape[1]
    Ep, NCp, NAp = _round_up(E, LANE), _round_up(NC, LANE), _round_up(NA, LANE)

    w1p = jnp.pad(w1f, ((0, 0), (0, Ep - E)))
    b1p = jnp.pad(b1f, ((0, 0), (0, Ep - E)))
    wap = jnp.pad(raw["attr_w"], ((0, 0), (0, NAp - NA)))
    bap = jnp.pad(raw["attr_b"], ((0, 0), (0, NAp - NA)))
    w2p = jnp.pad(raw["reid_w2"], ((0, Ep - E), (0, NCp - NC)))
    b2p = jnp.pad(raw["reid_b2"], ((0, 0), (0, NCp - NC)))

    return {
        "w_conv": raw["w_conv"].astype(jnp.bfloat16),
        "b_conv": raw["b_conv"],
        "gem_p": float(raw["gem_p"]),
        "w1a": jnp.concatenate([w1p, wap], axis=1).astype(jnp.bfloat16),   # (D, Ep+NAp)
        "b1a": jnp.concatenate([b1p, bap], axis=1),                        # (1, Ep+NAp) f32
        "w2": w2p.astype(jnp.bfloat16),                                    # (Ep, NCp)
        "b2": b2p,
        "embed_pad": Ep,
        "num_classes": NC,
        "n_attr": NA,
    }


# ---------------------------------------------------------------------------
# Pure-JAX reference (mirrors the module semantics; bf16-matched backbone matmul)
# ---------------------------------------------------------------------------
def reference_forward(x_nchw, raw):
    B, Cin, H, W = x_nchw.shape
    x = jnp.transpose(x_nchw, (0, 2, 3, 1)).reshape(B, H * W, Cin)
    xb = x.astype(jnp.bfloat16).astype(jnp.float32)
    wc = raw["w_conv"].astype(jnp.bfloat16).astype(jnp.float32)
    feat = jnp.einsum("bsc,cd->bsd", xb, wc) + raw["b_conv"]
    p = raw["gem_p"]
    feat = jnp.maximum(feat, GEM_EPS)
    shared = jnp.mean(feat ** p, axis=1) ** (1.0 / p)
    # ReID head (unfolded BN, f32)
    h1 = shared @ raw["reid_w1"] + raw["reid_b1"]
    h1 = (h1 - raw["bn_rmean"]) * jax.lax.rsqrt(raw["bn_rvar"] + BN_EPS) * raw["bn_gamma"] \
         + raw["bn_beta"]
    nrm = jnp.sqrt(jnp.sum(h1 * h1, axis=1, keepdims=True))
    h1 = h1 / jnp.maximum(nrm, 1e-12)
    reid = h1 @ raw["reid_w2"] + raw["reid_b2"]
    attrs = shared @ raw["attr_w"] + raw["attr_b"]
    return reid, attrs


if __name__ == "__main__":
    key = jax.random.PRNGKey(0)
    k_x, k_p = jax.random.split(key)

    # Small shapes consistent with the module's forward.
    B, Cin, H, W = 2, 4, 16, 16
    FEAT_DIM = 128     # backbone.output_dim stand-in (EfficientNet-B0 would be 1280)
    EMBED_DIM = 64     # ReIDHead embed_dim (default 256, shrunk for a small test)
    NUM_CLASSES = 63   # ReID identity classes

    x = jax.random.normal(k_x, (B, Cin, H, W), jnp.float32)
    raw = make_params(k_p, Cin, FEAT_DIM, EMBED_DIM, NUM_CLASSES)
    prep = prepare_params(raw)

    # tile_hw=128 -> 2 spatial grid steps: exercises the init/accumulate/finalize path.
    outputs = multi_task_reid_forward(x, prep, data_format="NCHW", tile_hw=128)
    outputs = jax.tree_util.tree_map(jax.block_until_ready, outputs)

    # Shape checks.
    assert outputs["reid"].shape == (B, NUM_CLASSES)
    assert outputs["gender"].shape == (B, 1)
    assert outputs["shoes_color"].shape == (B, 3)
    assert len(outputs["upper_colors"]) == 8 and outputs["upper_colors"][0].shape == (B, 8)
    assert len(outputs["lower_colors"]) == 7 and outputs["lower_colors"][0].shape == (B, 7)

    # Numerical check against the pure-JAX reference (loose tolerance for bf16 head weights).
    reid_ref, attrs_ref = reference_forward(x, raw)
    attrs_kernel = jnp.concatenate(
        [outputs[n] for n in ["gender", "top", "boots", "hat", "backpack", "bag", "handbag"]]
        + [outputs["shoes_color"]] + outputs["upper_colors"] + outputs["lower_colors"], axis=1)
    np.testing.assert_allclose(np.asarray(outputs["reid"]), np.asarray(reid_ref),
                               rtol=5e-2, atol=2e-2)
    np.testing.assert_allclose(np.asarray(attrs_kernel), np.asarray(attrs_ref),
                               rtol=5e-2, atol=2e-2)

    print("KERNEL_OK")
</pallas_src>

<mosaic_0001>
module attributes {stable_mosaic.version = 11 : i64} {
  func.func @fused_kernel(%arg0: i32, %arg1: i32, %arg2: memref<2x128x4xf32, #tpu.memory_space<vmem>>, %arg3: memref<4x128xbf16, #tpu.memory_space<vmem>>, %arg4: memref<1x128xf32, #tpu.memory_space<vmem>>, %arg5: memref<128x256xbf16, #tpu.memory_space<vmem>>, %arg6: memref<1x256xf32, #tpu.memory_space<vmem>>, %arg7: memref<128x128xbf16, #tpu.memory_space<vmem>>, %arg8: memref<1x128xf32, #tpu.memory_space<vmem>>, %arg9: memref<2x128xf32, #tpu.memory_space<vmem>>, %arg10: memref<2x128xf32, #tpu.memory_space<vmem>>, %arg11: memref<2x128xf32, #tpu.memory_space<vmem>>) attributes {dimension_semantics = [#tpu.dimension_semantics<parallel>, #tpu.dimension_semantics<arbitrary>], iteration_bounds = array<i64: 1, 2>, scalar_prefetch = 0 : i64, scratch_operands = 1 : i64, tpu.core_type = #tpu.core_type<tc>, window_params = [{transform_indices = @transform_0, window_bounds = array<i64: 2, 128, 4>}, {pipeline_mode = #tpu.pipeline_mode<synchronous>, transform_indices = @transform_1, window_bounds = array<i64: 4, 128>}, {pipeline_mode = #tpu.pipeline_mode<synchronous>, transform_indices = @transform_2, window_bounds = array<i64: 1, 128>}, {pipeline_mode = #tpu.pipeline_mode<synchronous>, transform_indices = @transform_3, window_bounds = array<i64: 128, 256>}, {pipeline_mode = #tpu.pipeline_mode<synchronous>, transform_indices = @transform_4, window_bounds = array<i64: 1, 256>}, {pipeline_mode = #tpu.pipeline_mode<synchronous>, transform_indices = @transform_5, window_bounds = array<i64: 128, 128>}, {pipeline_mode = #tpu.pipeline_mode<synchronous>, transform_indices = @transform_6, window_bounds = array<i64: 1, 128>}, {transform_indices = @transform_7, window_bounds = array<i64: 2, 128>}, {transform_indices = @transform_8, window_bounds = array<i64: 2, 128>}]} {
    %c0_i32 = arith.constant 0 : i32
    %0 = arith.cmpi eq, %arg1, %c0_i32 : i32
    %1 = arith.extui %0 : i1 to i32
    %c0_i32_0 = arith.constant 0 : i32
    %2 = arith.cmpi ne, %1, %c0_i32_0 : i32
    scf.if %2 {
      %cst_14 = arith.constant 0.000000e+00 : f32
      %23 = vector.broadcast %cst_14 : f32 to vector<2x128xf32>
      %c0_15 = arith.constant 0 : index
      %c0_16 = arith.constant 0 : index
      %24 = vector.load %arg11[%c0_15, %c0_16] : memref<2x128xf32, #tpu.memory_space<vmem>>, vector<2x128xf32>
      tpu.vector_store %arg11[%c0_15, %c0_16], %23 {strides = array<i32>} : memref<2x128xf32, #tpu.memory_space<vmem>>, vector<2x128xf32>,
    } else {
    }
    %c0 = arith.constant 0 : index
    %c0_1 = arith.constant 0 : index
    %c0_2 = arith.constant 0 : index
    %3 = vector.load %arg2[%c0, %c0_1, %c0_2] : memref<2x128x4xf32, #tpu.memory_space<vmem>>, vector<2x128x4xf32>
    %4 = arith.truncf %3 : vector<2x128x4xf32> to vector<2x128x4xbf16>
    %5 = vector.shape_cast %4 : vector<2x128x4xbf16> to vector<256x4xbf16>
    %c0_3 = arith.constant 0 : index
    %c0_4 = arith.constant 0 : index
    %6 = vector.load %arg3[%c0_3, %c0_4] : memref<4x128xbf16, #tpu.memory_space<vmem>>, vector<4x128xbf16>
    %cst = arith.constant dense<0.000000e+00> : vector<256x128xf32>
    %7 = tpu.matmul %5, %6, %cst {dimension_numbers = #tpu.dot_dimension_numbers<[1], [0], [0], [1], [0, 0, 1, 1], [], []>} : vector<256x4xbf16>, vector<4x128xbf16>, vector<256x128xf32> -> vector<256x128xf32>
    %c0_5 = arith.constant 0 : index
    %c0_6 = arith.constant 0 : index
    %8 = vector.load %arg4[%c0_5, %c0_6] : memref<1x128xf32, #tpu.memory_space<vmem>>, vector<1x128xf32>
    %9 = vector.broadcast %8 : vector<1x128xf32> to vector<256x128xf32>
    %10 = arith.addf %7, %9 : vector<256x128xf32>
    %cst_7 = arith.constant 9.99999997E-7 : f32
    %11 = vector.broadcast %cst_7 : f32 to vector<256x128xf32>
    %12 = arith.maximumf %10, %11 : vector<256x128xf32>
    %13 = arith.mulf %12, %12 : vector<256x128xf32>
    %14 = arith.mulf %13, %12 : vector<256x128xf32>
    %c0_8 = arith.constant 0 : index
    %c0_9 = arith.constant 0 : index
    %15 = vector.load %arg11[%c0_8, %c0_9] : memref<2x128xf32, #tpu.memory_space<vmem>>, vector<2x128xf32>
    %16 = vector.shape_cast %14 : vector<256x128xf32> to vector<2x128x128xf32>
    %cst_10 = arith.constant dense<0.000000e+00> : vector<2x128xf32>
    %17 = vector.multi_reduction <add>, %16, %cst_10 [1] : vector<2x128x128xf32> to vector<2x128xf32>
    %18 = arith.addf %15, %17 : vector<2x128xf32>
    %c0_11 = arith.constant 0 : index
    %c0_12 = arith.constant 0 : index
    %19 = vector.load %arg11[%c0_11, %c0_12] : memref<2x128xf32, #tpu.memory_space<vmem>>, vector<2x128xf32>
    tpu.vector_store %arg11[%c0_11, %c0_12], %18 {strides = array<i32>} : memref<2x128xf32, #tpu.memory_space<vmem>>, vector<2x128xf32>,
    %c1_i32 = arith.constant 1 : i32
    %20 = arith.cmpi eq, %arg1, %c1_i32 : i32
    %21 = arith.extui %20 : i1 to i32
    %c0_i32_13 = arith.constant 0 : i32
    %22 = arith.cmpi ne, %21, %c0_i32_13 : i32
    scf.if %22 {
      %c0_14 = arith.constant 0 : index
      %c0_15 = arith.constant 0 : index
      %23 = vector.load %arg11[%c0_14, %c0_15] : memref<2x128xf32, #tpu.memory_space<vmem>>, vector<2x128xf32>
      %cst_16 = arith.constant 3.906250e-03 : f32
      %24 = vector.broadcast %cst_16 : f32 to vector<2x128xf32>
      %25 = arith.mulf %23, %24 : vector<2x128xf32>
      %26 = math.log %25 : vector<2x128xf32>
      %cst_17 = arith.constant 0.333333343 : f32
      %27 = vector.broadcast %cst_17 : f32 to vector<2x128xf32>
      %28 = arith.mulf %26, %27 : vector<2x128xf32>
      %29 = math.exp %28 : vector<2x128xf32>
      %30 = arith.truncf %29 : vector<2x128xf32> to vector<2x128xbf16>
      %c0_18 = arith.constant 0 : index
      %c0_19 = arith.constant 0 : index
      %31 = vector.load %arg5[%c0_18, %c0_19] : memref<128x256xbf16, #tpu.memory_space<vmem>>, vector<128x256xbf16>
      %cst_20 = arith.constant dense<0.000000e+00> : vector<2x256xf32>
      %32 = tpu.matmul %30, %31, %cst_20 {dimension_numbers = #tpu.dot_dimension_numbers<[1], [0], [0], [1], [0, 0, 1, 1], [], []>} : vector<2x128xbf16>, vector<128x256xbf16>, vector<2x256xf32> -> vector<2x256xf32>
      %c0_21 = arith.constant 0 : index
      %c0_22 = arith.constant 0 : index
      %33 = vector.load %arg6[%c0_21, %c0_22] : memref<1x256xf32, #tpu.memory_space<vmem>>, vector<1x256xf32>
      %34 = vector.broadcast %33 : vector<1x256xf32> to vector<2x256xf32>
      %35 = arith.addf %32, %34 : vector<2x256xf32>
      %36 = vector.extract_strided_slice %35 {offsets = [0, 0], sizes = [2, 128], strides = [1, 1]} : vector<2x256xf32> to vector<2x128xf32>
      %37 = vector.extract_strided_slice %35 {offsets = [0, 128], sizes = [2, 128], strides = [1, 1]} : vector<2x256xf32> to vector<2x128xf32>
      %c0_23 = arith.constant 0 : index
      %c0_24 = arith.constant 0 : index
      %38 = vector.load %arg10[%c0_23, %c0_24] : memref<2x128xf32, #tpu.memory_space<vmem>>, vector<2x128xf32>
      tpu.vector_store %arg10[%c0_23, %c0_24], %37 {strides = array<i32>} : memref<2x128xf32, #tpu.memory_space<vmem>>, vector<2x128xf32>,
      %39 = arith.mulf %36, %36 : vector<2x128xf32>
      %cst_25 = arith.constant dense<0.000000e+00> : vector<2xf32>
      %40 = vector.multi_reduction <add>, %39, %cst_25 [1] : vector<2x128xf32> to vector<2xf32>
      %41 = vector.shape_cast %40 : vector<2xf32> to vector<2x1xf32>
      %cst_26 = arith.constant 1.000000e-24 : f32
      %42 = vector.broadcast %cst_26 : f32 to vector<2x1xf32>
      %43 = arith.maximumf %41, %42 : vector<2x1xf32>
      %44 = math.rsqrt %43 : vector<2x1xf32>
      %45 = vector.broadcast %44 : vector<2x1xf32> to vector<2x128xf32>
      %46 = arith.mulf %36, %45 : vector<2x128xf32>
      %47 = arith.truncf %46 : vector<2x128xf32> to vector<2x128xbf16>
      %c0_27 = arith.constant 0 : index
      %c0_28 = arith.constant 0 : index
      %48 = vector.load %arg7[%c0_27, %c0_28] : memref<128x128xbf16, #tpu.memory_space<vmem>>, vector<128x128xbf16>
      %cst_29 = arith.constant dense<0.000000e+00> : vector<2x128xf32>
      %49 = tpu.matmul %47, %48, %cst_29 {dimension_numbers = #tpu.dot_dimension_numbers<[1], [0], [0], [1], [0, 0, 1, 1], [], []>} : vector<2x128xbf16>, vector<128x128xbf16>, vector<2x128xf32> -> vector<2x128xf32>
      %c0_30 = arith.constant 0 : index
      %c0_31 = arith.constant 0 : index
      %50 = vector.load %arg8[%c0_30, %c0_31] : memref<1x128xf32, #tpu.memory_space<vmem>>, vector<1x128xf32>
      %51 = vector.broadcast %50 : vector<1x128xf32> to vector<2x128xf32>
      %52 = arith.addf %49, %51 : vector<2x128xf32>
      %c0_32 = arith.constant 0 : index
      %c0_33 = arith.constant 0 : index
      %53 = vector.load %arg9[%c0_32, %c0_33] : memref<2x128xf32, #tpu.memory_space<vmem>>, vector<2x128xf32>
      tpu.vector_store %arg9[%c0_32, %c0_33], %52 {strides = array<i32>} : memref<2x128xf32, #tpu.memory_space<vmem>>, vector<2x128xf32>,
    } else {
    }
    return
  }
  func.func @transform_0(%arg0: i32, %arg1: i32) -> (i32, i32, i32) {
    %c0_i32 = arith.constant 0 : i32
    %c0_i32_0 = arith.constant 0 : i32
    return %arg0, %arg1, %c0_i32 : i32, i32, i32
  }
  func.func @transform_1(%arg0: i32, %arg1: i32) -> (i32, i32) {
    %c0_i32 = arith.constant 0 : i32
    %c0_i32_0 = arith.constant 0 : i32
    %c0_i32_1 = arith.constant 0 : i32
    return %c0_i32, %c0_i32_0 : i32, i32
  }
  func.func @transform_2(%arg0: i32, %arg1: i32) -> (i32, i32) {
    %c0_i32 = arith.constant 0 : i32
    %c0_i32_0 = arith.constant 0 : i32
    %c0_i32_1 = arith.constant 0 : i32
    return %c0_i32, %c0_i32_0 : i32, i32
  }
  func.func @transform_3(%arg0: i32, %arg1: i32) -> (i32, i32) {
    %c0_i32 = arith.constant 0 : i32
    %c0_i32_0 = arith.constant 0 : i32
    %c0_i32_1 = arith.constant 0 : i32
    return %c0_i32, %c0_i32_0 : i32, i32
  }
  func.func @transform_4(%arg0: i32, %arg1: i32) -> (i32, i32) {
    %c0_i32 = arith.constant 0 : i32
    %c0_i32_0 = arith.constant 0 : i32
    %c0_i32_1 = arith.constant 0 : i32
    return %c0_i32, %c0_i32_0 : i32, i32
  }
  func.func @transform_5(%arg0: i32, %arg1: i32) -> (i32, i32) {
    %c0_i32 = arith.constant 0 : i32
    %c0_i32_0 = arith.constant 0 : i32
    %c0_i32_1 = arith.constant 0 : i32
    return %c0_i32, %c0_i32_0 : i32, i32
  }
  func.func @transform_6(%arg0: i32, %arg1: i32) -> (i32, i32) {
    %c0_i32 = arith.constant 0 : i32
    %c0_i32_0 = arith.constant 0 : i32
    %c0_i32_1 = arith.constant 0 : i32
    return %c0_i32, %c0_i32_0 : i32, i32
  }
  func.func @transform_7(%arg0: i32, %arg1: i32) -> (i32, i32) {
    %c0_i32 = arith.constant 0 : i32
    %c0_i32_0 = arith.constant 0 : i32
    return %arg0, %c0_i32 : i32, i32
  }
  func.func @transform_8(%arg0: i32, %arg1: i32) -> (i32, i32) {
    %c0_i32 = arith.constant 0 : i32
    %c0_i32_0 = arith.constant 0 : i32
    return %arg0, %c0_i32 : i32, i32
  }
}

</mosaic_0001>

<llo_original>
// kernel: tpu_custom_call.1
$region0: #{tpu_custom_call.1}
  #allocation0 [shape = 'u32[]', space=smem, size = 0x4, offset = 0x4, fixed_abs, tag = 'smem constant byte address 0x4 - core index']
  #allocation1 [shape = 'u32[144,128]{1,0:T(1,128)}', space=vmem, size = 0x12000, scoped, tag = 'internal scratch']
  #allocation2 [shape = 'f32[2,128]{1,0:T(2,128)}', space=vmem, size = 0x400, scoped, tag = 'scratch operand']
  %s0 = inlined_call_operand.vmem [shape: f32[2,256,4], index: 0, kind: input, shape index: {}]
  %s1 = inlined_call_operand.vmem [shape: bf16[4,128], index: 1, kind: input, shape index: {}]
  %s2 = inlined_call_operand.vmem [shape: f32[1,128], index: 2, kind: input, shape index: {}]
  %s3 = inlined_call_operand.vmem [shape: bf16[128,256], index: 3, kind: input, shape index: {}]
  %s4 = inlined_call_operand.vmem [shape: f32[1,256], index: 4, kind: input, shape index: {}]
  %s5 = inlined_call_operand.vmem [shape: bf16[128,128], index: 5, kind: input, shape index: {}]
  %s6 = inlined_call_operand.vmem [shape: f32[1,128], index: 6, kind: input, shape index: {}]
  %s7 = inlined_call_operand.hbm [shape: f32[2,128], index: 7, kind: output, shape index: {0}]
  %s8 = inlined_call_operand.hbm [shape: f32[2,128], index: 8, kind: output, shape index: {1}]
  %9 = xla_tuple %s7, %s8
  %s10 = sld [smem:[#allocation0]]
  $region115: #{tpu_custom_call.1} parent=0
    _
  %s12 = ssub.s32 1, %s10
  %s13 = scalar_select 0, %s12, %s10
  $region1: #{tpu_custom_call.1} parent=0
    #allocation3 [shape = 'u8[262144]{0}', space=vmem, size = 0x40000, scoped, tag = 'input window, operand 0']
    #allocation4 [shape = 'u8[1024]{0}', space=vmem, size = 0x400, scoped, tag = 'output window, operand 0, single buffered']
    #allocation5 [shape = 's32[2]{0}', space=sflag, size = 0x8, scoped, tag = 'scoped memory for tpu_custom_call.1']
    #allocation6 [shape = 'u8[1024]{0}', space=vmem, size = 0x400, scoped, tag = 'output window, operand 1, single buffered']
    #allocation7 [shape = 's32[1]{0}', space=sflag, size = 0x4, scoped, tag = 'scoped memory for tpu_custom_call.1']
    %14 = vsyncpa [#allocation5], 0
    %15 = vsyncpa [#allocation7], 0
    loop: start=0, step=1, limit=4
    $region2: #{tpu_custom_call.1} parent=1 // loop_pre_header
      _
    $region3: #{tpu_custom_call.1} parent=1 // loop_header
      %s17 = sphi 0, %s21
      %p18 = scmp.ge.s32.totalorder %s17, 4
      %s24 = sphi 0, %s36
      %s25 = sphi 0, %s32
      %s26 = sphi 0, %s24
      %s27 = sphi 0, %s25
      %s28 = sphi 0, %s26
      %s29 = sphi 0, %s27
      %s41 = sphi 0, %s43
      %s44 = sphi 0, %s41
      %s45 = sphi 0, %s44
      %s61 = sphi 0, %s45
      %s65 = sphi 0, %s65
      %s67 = sphi 0, %s65
      %s68 = sphi 0, %s67
      %s82 = sphi 0, %s68
      %s86 = sphi 0, %s86
      %s88 = sphi 0, %s86
      %s89 = sphi 0, %s88
      %s103 = sphi 0, %s89
      %s107 = sphi 0, %s107
      %s109 = sphi 0, %s107
      %s110 = sphi 0, %s109
      %s124 = sphi 0, %s110
      %s128 = sphi 0, %s128
      %s130 = sphi 0, %s128
      %s131 = sphi 0, %s130
      %s145 = sphi 0, %s131
      %s149 = sphi 0, %s149
      %s151 = sphi 0, %s149
      %s152 = sphi 0, %s151
      %s166 = sphi 0, %s152
      %s170 = sphi 0, %s170
      %s172 = sphi 0, %s170
      %s173 = sphi 0, %s172
      %s187 = sphi 0, %s173
      %s193 = sphi 0, %s195
      %s196 = sphi 0, %s193
      %s197 = sphi 0, %s196
      %s213 = sphi 0, %s197
      %s219 = sphi 0, %s221
      %s222 = sphi 0, %s219
      %s223 = sphi 0, %s222
      %s239 = sphi 0, %s223
    $region4: #{tpu_custom_call.1} parent=1 // loop_header_branch
      %20 = sbr.rel (%p18) target = $region8
    $region5: #{tpu_custom_call.1} parent=1 // loop_body
      %s22 = ssub.s32 %s17, 1
      %s23 = ssub.s32 %s17, 2
      %s30 = sadd.s32 1, %s25
      %p31 = scmp.ge.s32.totalorder %s30, 2
      %s32 = scalar_select %p31, 0, %s30
      %s33 = sadd.s32 1, %s24
      %s34 = scalar_select %p31, %s33, %s24
      %p35 = scmp.ge.s32.totalorder %s34, 1
      %s36 = scalar_select %p35, 0, %s34
      %s37 = ssub.s32 %s24, %s36
      %s38 = ssub.s32 %s25, %s32
      %s39 = sor.u32 %s37, %s38
      %p40 = scmp.eq.s32.totalorder %s39, 0
      %s42 = sadd.s32 %s41, 1
      %s43 = scalar_select %p40, %s41, %s42
      %p46 = pneg %p40
      %p47 = scmp.eq.s32.totalorder %s17, 1
      %p48 = por %p46, %p47
      %p49 = scmp.ne.s32.totalorder %s41, %s44
      %p50 = scmp.eq.s32.totalorder %s17, 0
      %p51 = por %p49, %p50
      %p52 = scmp.ne.s32.totalorder %s41, %s44
      %p53 = scmp.eq.s32.totalorder %s22, 1
      %p54 = por %p52, %p53
      %p55 = scmp.ne.s32.totalorder %s44, %s45
      %p56 = scmp.eq.s32.totalorder %s22, 0
      %p57 = por %p55, %p56
      %p58 = scmp.ne.s32.totalorder %s44, %s45
      %p59 = scmp.eq.s32.totalorder %s23, 1
      %p60 = por %p58, %p59
      %p62 = scmp.ne.s32.totalorder %s45, %s61
      %p63 = scmp.eq.s32.totalorder %s23, 0
      %p64 = por %p62, %p63
      %s66 = sadd.s32 %s65, 1
      %p69 = scmp.eq.s32.totalorder %s17, 1
      %p70 = scmp.ne.s32.totalorder %s65, %s67
      %p71 = scmp.eq.s32.totalorder %s17, 0
      %p72 = por %p70, %p71
      %p73 = scmp.ne.s32.totalorder %s65, %s67
      %p74 = scmp.eq.s32.totalorder %s22, 1
      %p75 = por %p73, %p74
      %p76 = scmp.ne.s32.totalorder %s67, %s68
      %p77 = scmp.eq.s32.totalorder %s22, 0
      %p78 = por %p76, %p77
      %p79 = scmp.ne.s32.totalorder %s67, %s68
      %p80 = scmp.eq.s32.totalorder %s23, 1
      %p81 = por %p79, %p80
      %p83 = scmp.ne.s32.totalorder %s68, %s82
      %p84 = scmp.eq.s32.totalorder %s23, 0
      %p85 = por %p83, %p84
      %s87 = sadd.s32 %s86, 1
      %p90 = scmp.eq.s32.totalorder %s17, 1
      %p91 = scmp.ne.s32.totalorder %s86, %s88
      %p92 = scmp.eq.s32.totalorder %s17, 0
      %p93 = por %p91, %p92
      %p94 = scmp.ne.s32.totalorder %s86, %s88
      %p95 = scmp.eq.s32.totalorder %s22, 1
      %p96 = por %p94, %p95
      %p97 = scmp.ne.s32.totalorder %s88, %s89
      %p98 = scmp.eq.s32.totalorder %s22, 0
      %p99 = por %p97, %p98
      %p100 = scmp.ne.s32.totalorder %s88, %s89
      %p101 = scmp.eq.s32.totalorder %s23, 1
      %p102 = por %p100, %p101
      %p104 = scmp.ne.s32.totalorder %s89, %s103
      %p105 = scmp.eq.s32.totalorder %s23, 0
      %p106 = por %p104, %p105
      %s108 = sadd.s32 %s107, 1
      %p111 = scmp.eq.s32.totalorder %s17, 1
      %p112 = scmp.ne.s32.totalorder %s107, %s109
      %p113 = scmp.eq.s32.totalorder %s17, 0
      %p114 = por %p112, %p113
      %p115 = scmp.ne.s32.totalorder %s107, %s109
      %p116 = scmp.eq.s32.totalorder %s22, 1
      %p117 = por %p115, %p116
      %p118 = scmp.ne.s32.totalorder %s109, %s110
      %p119 = scmp.eq.s32.totalorder %s22, 0
      %p120 = por %p118, %p119
      %p121 = scmp.ne.s32.totalorder %s109, %s110
      %p122 = scmp.eq.s32.totalorder %s23, 1
      %p123 = por %p121, %p122
      %p125 = scmp.ne.s32.totalorder %s110, %s124
      %p126 = scmp.eq.s32.totalorder %s23, 0
      %p127 = por %p125, %p126
      %s129 = sadd.s32 %s128, 1
      %p132 = scmp.eq.s32.totalorder %s17, 1
      %p133 = scmp.ne.s32.totalorder %s128, %s130
      %p134 = scmp.eq.s32.totalorder %s17, 0
      %p135 = por %p133, %p134
      %p136 = scmp.ne.s32.totalorder %s128, %s130
      %p137 = scmp.eq.s32.totalorder %s22, 1
      %p138 = por %p136, %p137
      %p139 = scmp.ne.s32.totalorder %s130, %s131
      %p140 = scmp.eq.s32.totalorder %s22, 0
      %p141 = por %p139, %p140
      %p142 = scmp.ne.s32.totalorder %s130, %s131
      %p143 = scmp.eq.s32.totalorder %s23, 1
      %p144 = por %p142, %p143
      %p146 = scmp.ne.s32.totalorder %s131, %s145
      %p147 = scmp.eq.s32.totalorder %s23, 0
      %p148 = por %p146, %p147
      %s150 = sadd.s32 %s149, 1
      %p153 = scmp.eq.s32.totalorder %s17, 1
      %p154 = scmp.ne.s32.totalorder %s149, %s151
      %p155 = scmp.eq.s32.totalorder %s17, 0
      %p156 = por %p154, %p155
      %p157 = scmp.ne.s32.totalorder %s149, %s151
      %p158 = scmp.eq.s32.totalorder %s22, 1
      %p159 = por %p157, %p158
      %p160 = scmp.ne.s32.totalorder %s151, %s152
      %p161 = scmp.eq.s32.totalorder %s22, 0
      %p162 = por %p160, %p161
      %p163 = scmp.ne.s32.totalorder %s151, %s152
      %p164 = scmp.eq.s32.totalorder %s23, 1
      %p165 = por %p163, %p164
      %p167 = scmp.ne.s32.totalorder %s152, %s166
      %p168 = scmp.eq.s32.totalorder %s23, 0
      %p169 = por %p167, %p168
      %s171 = sadd.s32 %s170, 1
      %p174 = scmp.eq.s32.totalorder %s17, 1
      %p175 = scmp.ne.s32.totalorder %s170, %s172
      %p176 = scmp.eq.s32.totalorder %s17, 0
      %p177 = por %p175, %p176
      %p178 = scmp.ne.s32.totalorder %s170, %s172
      %p179 = scmp.eq.s32.totalorder %s22, 1
      %p180 = por %p178, %p179
      %p181 = scmp.ne.s32.totalorder %s172, %s173
      %p182 = scmp.eq.s32.totalorder %s22, 0
      %p183 = por %p181, %p182
      %p184 = scmp.ne.s32.totalorder %s172, %s173
      %p185 = scmp.eq.s32.totalorder %s23, 1
      %p186 = por %p184, %p185
      %p188 = scmp.ne.s32.totalorder %s173, %s187
      %p189 = scmp.eq.s32.totalorder %s23, 0
      %p190 = por %p188, %p189
      %s191 = ssub.s32 %s24, %s36
      %p192 = scmp.eq.s32.totalorder %s191, 0
      %s194 = sadd.s32 %s193, 1
      %s195 = scalar_select %p192, %s193, %s194
      %p198 = pneg %p192
      %p199 = scmp.eq.s32.totalorder %s17, 1
      %p200 = por %p198, %p199
      %p201 = scmp.ne.s32.totalorder %s193, %s196
      %p202 = scmp.eq.s32.totalorder %s17, 0
      %p203 = por %p201, %p202
      %p204 = scmp.ne.s32.totalorder %s193, %s196
      %p205 = scmp.eq.s32.totalorder %s22, 1
      %p206 = por %p204, %p205
      %p207 = scmp.ne.s32.totalorder %s196, %s197
      %p208 = scmp.eq.s32.totalorder %s22, 0
      %p209 = por %p207, %p208
      %p210 = scmp.ne.s32.totalorder %s196, %s197
      %p211 = scmp.eq.s32.totalorder %s23, 1
      %p212 = por %p210, %p211
      %p214 = scmp.ne.s32.totalorder %s197, %s213
      %p215 = scmp.eq.s32.totalorder %s23, 0
      %p216 = por %p214, %p215
      %s217 = ssub.s32 %s24, %s36
      %p218 = scmp.eq.s32.totalorder %s217, 0
      %s220 = sadd.s32 %s219, 1
      %s221 = scalar_select %p218, %s219, %s220
      %p224 = pneg %p218
      %p225 = scmp.eq.s32.totalorder %s17, 1
      %p226 = por %p224, %p225
      %p227 = scmp.ne.s32.totalorder %s219, %s222
      %p228 = scmp.eq.s32.totalorder %s17, 0
      %p229 = por %p227, %p228
      %p230 = scmp.ne.s32.totalorder %s219, %s222
      %p231 = scmp.eq.s32.totalorder %s22, 1
      %p232 = por %p230, %p231
      %p233 = scmp.ne.s32.totalorder %s222, %s223
      %p234 = scmp.eq.s32.totalorder %s22, 0
      %p235 = por %p233, %p234
      %p236 = scmp.ne.s32.totalorder %s222, %s223
      %p237 = scmp.eq.s32.totalorder %s23, 1
      %p238 = por %p236, %p237
      %p240 = scmp.ne.s32.totalorder %s223, %s239
      %p241 = scmp.eq.s32.totalorder %s23, 0
      %p242 = por %p240, %p241
      %p243 = scmp.le.s32.totalorder 1, %s17
      %p244 = scmp.lt.s32.totalorder %s17, 3
      %p245 = pnand %p243, %p244
      %p246 = pneg %p245
      // Predicated region
      $region9: #{tpu_custom_call.1} parent=5 // pred_check
        _
      $region10: #{tpu_custom_call.1} parent=5 // pred_check_branch
        %248 = sbr.rel (%p245) target = $region12
      $region11: #{tpu_custom_call.1} parent=5 // pred_region
        %s249 = ssub.s32 %s17, 1
        // Predicated region
        $region13: #{tpu_custom_call.1} parent=11 // pred_check
          %p250 = pneg %p78
        $region14: #{tpu_custom_call.1} parent=11 // pred_check_branch
          %252 = sbr.rel (%p250) target = $region16
        $region15: #{tpu_custom_call.1} parent=11 // pred_region
          _
        $region16: #{tpu_custom_call.1} parent=11 // pred_fallthru
          _
        // Predicated region
        $region17: #{tpu_custom_call.1} parent=11 // pred_check
          %p253 = pneg %p99
        $region18: #{tpu_custom_call.1} parent=11 // pred_check_branch
          %255 = sbr.rel (%p253) target = $region20
        $region19: #{tpu_custom_call.1} parent=11 // pred_region
          _
        $region20: #{tpu_custom_call.1} parent=11 // pred_fallthru
          _
        // Predicated region
        $region21: #{tpu_custom_call.1} parent=11 // pred_check
          %p256 = pneg %p120
        $region22: #{tpu_custom_call.1} parent=11 // pred_check_branch
          %258 = sbr.rel (%p256) target = $region24
        $region23: #{tpu_custom_call.1} parent=11 // pred_region
          _
        $region24: #{tpu_custom_call.1} parent=11 // pred_fallthru
          _
        // Predicated region
        $region25: #{tpu_custom_call.1} parent=11 // pred_check
          %p259 = pneg %p141
        $region26: #{tpu_custom_call.1} parent=11 // pred_check_branch
          %261 = sbr.rel (%p259) target = $region28
        $region27: #{tpu_custom_call.1} parent=11 // pred_region
          _
        $region28: #{tpu_custom_call.1} parent=11 // pred_fallthru
          _
        // Predicated region
        $region29: #{tpu_custom_call.1} parent=11 // pred_check
          %p262 = pneg %p162
        $region30: #{tpu_custom_call.1} parent=11 // pred_check_branch
          %264 = sbr.rel (%p262) target = $region32
        $region31: #{tpu_custom_call.1} parent=11 // pred_region
          _
        $region32: #{tpu_custom_call.1} parent=11 // pred_fallthru
          _
        // Predicated region
        $region33: #{tpu_custom_call.1} parent=11 // pred_check
          %p265 = pneg %p183
        $region34: #{tpu_custom_call.1} parent=11 // pred_check_branch
          %267 = sbr.rel (%p265) target = $region36
        $region35: #{tpu_custom_call.1} parent=11 // pred_region
          _
        $region36: #{tpu_custom_call.1} parent=11 // pred_fallthru
          _
      $region12: #{tpu_custom_call.1} parent=5 // pred_fallthru
        _
      %p268 = scmp.lt.s32.totalorder %s17, 2
      // Predicated region
      $region37: #{tpu_custom_call.1} parent=5 // pred_check
        %p269 = pneg %p268
      $region38: #{tpu_custom_call.1} parent=5 // pred_check_branch
        %271 = sbr.rel (%p269) target = $region40
      $region39: #{tpu_custom_call.1} parent=5 // pred_region
        // Predicated region
        $region41: #{tpu_custom_call.1} parent=39 // pred_check
          %p272 = pneg %p51
        $region42: #{tpu_custom_call.1} parent=39 // pred_check_branch
          %274 = sbr.rel (%p272) target = $region44
        $region43: #{tpu_custom_call.1} parent=39 // pred_region
          %s275 = sand.u32 %s41, 1
          %s276 = sand.u32 %s41, 1
          %s277 = smul.addr %s276, 256
          %s278 = scalar_lea.vmem [#allocation3], %s277
          %s279 = smul.u32 2, %s24
          %s280 = smul.u32 16, %s25
          %s281 = smul.addr %s279, 32
          %s282 = sadd.s32 %s280, %s281
          %s283 = smul.addr %s282, 8
          %s284 = scalar_lea.vmem %s0, %s283
          // Predicated region
          $region45: #{tpu_custom_call.1} parent=43 // pred_check
            _
          $region46: #{tpu_custom_call.1} parent=43 // pred_check_branch
            %286 = sbr.rel (0) target = $region48
          $region47: #{tpu_custom_call.1} parent=43 // pred_region
            // Predicated region
            $region49: #{tpu_custom_call.1} parent=47 // pred_check
              _
            $region50: #{tpu_custom_call.1} parent=47 // pred_check_branch
              %288 = sbr.rel (0) target = $region52
            $region51: #{tpu_custom_call.1} parent=47 // pred_region
              // Predicated region
              $region64: #{tpu_custom_call.1} parent=51 // pred_check
                _
              $region65: #{tpu_custom_call.1} parent=51 // pred_check_branch
                %365 = sbr.rel (0) target = $region67
              $region66: #{tpu_custom_call.1} parent=51 // pred_region
                loop: start=0, step=1, limit=1
                $region68: #{tpu_custom_call.1} parent=66 // loop_pre_header
                  _
                $region69: #{tpu_custom_call.1} parent=66 // loop_header
                  %s367 = sphi 0, %s371
                  %p368 = scmp.ge.s32.totalorder %s367, 1
                  %s372 = sphi %s284, %s284
                  %s373 = sphi %s278, %s278
                $region70: #{tpu_custom_call.1} parent=66 // loop_header_branch
                  %370 = sbr.rel (%p368) target = $region74
                $region71: #{tpu_custom_call.1} parent=66 // loop_body
                  %v374 = vld [vmem:[%s372] sm:$0xff]
                  %375 = vst [vmem:[%s373] sm:$0xff] %v374
                  %v376 = vld [vmem:[%s372 + $0x8] sm:$0xff]
                  %377 = vst [vmem:[%s373 + $0x8] sm:$0xff] %v376
                  %v378 = vld [vmem:[%s372 + $0x10] sm:$0xff]
                  %379 = vst [vmem:[%s373 + $0x10] sm:$0xff] %v378
                  %v380 = vld [vmem:[%s372 + $0x18] sm:$0xff]
                  %381 = vst [vmem:[%s373 + $0x18] sm:$0xff] %v380
                  %v382 = vld [vmem:[%s372 + $0x20] sm:$0xff]
                  %383 = vst [vmem:[%s373 + $0x20] sm:$0xff] %v382
                  %v384 = vld [vmem:[%s372 + $0x28] sm:$0xff]
                  %385 = vst [vmem:[%s373 + $0x28] sm:$0xff] %v384
                  %v386 = vld [vmem:[%s372 + $0x30] sm:$0xff]
                  %387 = vst [vmem:[%s373 + $0x30] sm:$0xff] %v386
                  %v388 = vld [vmem:[%s372 + $0x38] sm:$0xff]
                  %389 = vst [vmem:[%s373 + $0x38] sm:$0xff] %v388
                  %v390 = vld [vmem:[%s372 + $0x40] sm:$0xff]
                  %391 = vst [vmem:[%s373 + $0x40] sm:$0xff] %v390
                  %v392 = vld [vmem:[%s372 + $0x48] sm:$0xff]
                  %393 = vst [vmem:[%s373 + $0x48] sm:$0xff] %v392
                  %v394 = vld [vmem:[%s372 + $0x50] sm:$0xff]
                  %395 = vst [vmem:[%s373 + $0x50] sm:$0xff] %v394
                  %v396 = vld [vmem:[%s372 + $0x58] sm:$0xff]
                  %397 = vst [vmem:[%s373 + $0x58] sm:$0xff] %v396
                  %v398 = vld [vmem:[%s372 + $0x60] sm:$0xff]
                  %399 = vst [vmem:[%s373 + $0x60] sm:$0xff] %v398
                  %v400 = vld [vmem:[%s372 + $0x68] sm:$0xff]
                  %401 = vst [vmem:[%s373 + $0x68] sm:$0xff] %v400
                  %v402 = vld [vmem:[%s372 + $0x70] sm:$0xff]
                  %403 = vst [vmem:[%s373 + $0x70] sm:$0xff] %v402
                  %v404 = vld [vmem:[%s372 + $0x78] sm:$0xff]
                  %405 = vst [vmem:[%s373 + $0x78] sm:$0xff] %v404
                  %v406 = vld [vmem:[%s372 + $0x100] sm:$0xff]
                  %407 = vst [vmem:[%s373 + $0x80] sm:$0xff] %v406
                  %v408 = vld [vmem:[%s372 + $0x108] sm:$0xff]
                  %409 = vst [vmem:[%s373 + $0x88] sm:$0xff] %v408
                  %v410 = vld [vmem:[%s372 + $0x110] sm:$0xff]
                  %411 = vst [vmem:[%s373 + $0x90] sm:$0xff] %v410
                  %v412 = vld [vmem:[%s372 + $0x118] sm:$0xff]
                  %413 = vst [vmem:[%s373 + $0x98] sm:$0xff] %v412
                  %v414 = vld [vmem:[%s372 + $0x120] sm:$0xff]
                  %415 = vst [vmem:[%s373 + $0xa0] sm:$0xff] %v414
                  %v416 = vld [vmem:[%s372 + $0x128] sm:$0xff]
                  %417 = vst [vmem:[%s373 + $0xa8] sm:$0xff] %v416
                  %v418 = vld [vmem:[%s372 + $0x130] sm:$0xff]
                  %419 = vst [vmem:[%s373 + $0xb0] sm:$0xff] %v418
                  %v420 = vld [vmem:[%s372 + $0x138] sm:$0xff]
                  %421 = vst [vmem:[%s373 + $0xb8] sm:$0xff] %v420
                  %v422 = vld [vmem:[%s372 + $0x140] sm:$0xff]
                  %423 = vst [vmem:[%s373 + $0xc0] sm:$0xff] %v422
                  %v424 = vld [vmem:[%s372 + $0x148] sm:$0xff]
                  %425 = vst [vmem:[%s373 + $0xc8] sm:$0xff] %v424
                  %v426 = vld [vmem:[%s372 + $0x150] sm:$0xff]
                  %427 = vst [vmem:[%s373 + $0xd0] sm:$0xff] %v426
                  %v428 = vld [vmem:[%s372 + $0x158] sm:$0xff]
                  %429 = vst [vmem:[%s373 + $0xd8] sm:$0xff] %v428
                  %v430 = vld [vmem:[%s372 + $0x160] sm:$0xff]
                  %431 = vst [vmem:[%s373 + $0xe0] sm:$0xff] %v430
                  %v432 = vld [vmem:[%s372 + $0x168] sm:$0xff]
                  %433 = vst [vmem:[%s373 + $0xe8] sm:$0xff] %v432
                  %v434 = vld [vmem:[%s372 + $0x170] sm:$0xff]
                  %435 = vst [vmem:[%s373 + $0xf0] sm:$0xff] %v434
                  %v436 = vld [vmem:[%s372 + $0x178] sm:$0xff]
                  %437 = vst [vmem:[%s373 + $0xf8] sm:$0xff] %v436
                $region72: #{tpu_custom_call.1} parent=66 // loop_footer
                  %s371 = sadd.s32 1, %s367
                $region73: #{tpu_custom_call.1} parent=66 // loop_footer_branch
                  %366 = sbr.rel target = $region69
                $region74: #{tpu_custom_call.1} parent=66 // loop_exit
                  _
              $region67: #{tpu_custom_call.1} parent=51 // pred_fallthru
                _
              // Predicated region
              $region75: #{tpu_custom_call.1} parent=51 // pred_check
                _
              $region76: #{tpu_custom_call.1} parent=51 // pred_check_branch
                %439 = sbr.rel target = $region78
              $region77: #{tpu_custom_call.1} parent=51 // pred_region
                _
              $region78: #{tpu_custom_call.1} parent=51 // pred_fallthru
                _
            $region52: #{tpu_custom_call.1} parent=47 // pred_fallthru
              _
            // Predicated region
            $region53: #{tpu_custom_call.1} parent=47 // pred_check
              _
            $region54: #{tpu_custom_call.1} parent=47 // pred_check_branch
              %290 = sbr.rel target = $region56
            $region55: #{tpu_custom_call.1} parent=47 // pred_region
              loop: start=0, step=1, limit=1
              $region57: #{tpu_custom_call.1} parent=55 // loop_pre_header
                _
              $region58: #{tpu_custom_call.1} parent=55 // loop_header
                %s293 = sphi 0, %s297
                %p294 = scmp.ge.s32.totalorder %s293, 1
                %s298 = sphi %s284, %s284
                %s299 = sphi %s278, %s278
              $region59: #{tpu_custom_call.1} parent=55 // loop_header_branch
                %296 = sbr.rel (%p294) target = $region63
              $region60: #{tpu_custom_call.1} parent=55 // loop_body
                %v300 = vld [vmem:[%s298] sm:$0xff]
                %301 = vst [vmem:[%s299] sm:$0xff] %v300
                %v302 = vld [vmem:[%s298 + $0x8] sm:$0xff]
                %303 = vst [vmem:[%s299 + $0x8] sm:$0xff] %v302
                %v304 = vld [vmem:[%s298 + $0x10] sm:$0xff]
                %305 = vst [vmem:[%s299 + $0x10] sm:$0xff] %v304
                %v306 = vld [vmem:[%s298 + $0x18] sm:$0xff]
                %307 = vst [vmem:[%s299 + $0x18] sm:$0xff] %v306
                %v308 = vld [vmem:[%s298 + $0x20] sm:$0xff]
                %309 = vst [vmem:[%s299 + $0x20] sm:$0xff] %v308
                %v310 = vld [vmem:[%s298 + $0x28] sm:$0xff]
                %311 = vst [vmem:[%s299 + $0x28] sm:$0xff] %v310
                %v312 = vld [vmem:[%s298 + $0x30] sm:$0xff]
                %313 = vst [vmem:[%s299 + $0x30] sm:$0xff] %v312
                %v314 = vld [vmem:[%s298 + $0x38] sm:$0xff]
                %315 = vst [vmem:[%s299 + $0x38] sm:$0xff] %v314
                %v316 = vld [vmem:[%s298 + $0x40] sm:$0xff]
                %317 = vst [vmem:[%s299 + $0x40] sm:$0xff] %v316
                %v318 = vld [vmem:[%s298 + $0x48] sm:$0xff]
                %319 = vst [vmem:[%s299 + $0x48] sm:$0xff] %v318
                %v320 = vld [vmem:[%s298 + $0x50] sm:$0xff]
                %321 = vst [vmem:[%s299 + $0x50] sm:$0xff] %v320
                %v322 = vld [vmem:[%s298 + $0x58] sm:$0xff]
                %323 = vst [vmem:[%s299 + $0x58] sm:$0xff] %v322
                %v324 = vld [vmem:[%s298 + $0x60] sm:$0xff]
                %325 = vst [vmem:[%s299 + $0x60] sm:$0xff] %v324
                %v326 = vld [vmem:[%s298 + $0x68] sm:$0xff]
                %327 = vst [vmem:[%s299 + $0x68] sm:$0xff] %v326
                %v328 = vld [vmem:[%s298 + $0x70] sm:$0xff]
                %329 = vst [vmem:[%s299 + $0x70] sm:$0xff] %v328
                %v330 = vld [vmem:[%s298 + $0x78] sm:$0xff]
                %331 = vst [vmem:[%s299 + $0x78] sm:$0xff] %v330
                %v332 = vld [vmem:[%s298 + $0x100] sm:$0xff]
                %333 = vst [vmem:[%s299 + $0x80] sm:$0xff] %v332
                %v334 = vld [vmem:[%s298 + $0x108] sm:$0xff]
                %335 = vst [vmem:[%s299 + $0x88] sm:$0xff] %v334
                %v336 = vld [vmem:[%s298 + $0x110] sm:$0xff]
                %337 = vst [vmem:[%s299 + $0x90] sm:$0xff] %v336
                %v338 = vld [vmem:[%s298 + $0x118] sm:$0xff]
                %339 = vst [vmem:[%s299 + $0x98] sm:$0xff] %v338
                %v340 = vld [vmem:[%s298 + $0x120] sm:$0xff]
                %341 = vst [vmem:[%s299 + $0xa0] sm:$0xff] %v340
                %v342 = vld [vmem:[%s298 + $0x128] sm:$0xff]
                %343 = vst [vmem:[%s299 + $0xa8] sm:$0xff] %v342
                %v344 = vld [vmem:[%s298 + $0x130] sm:$0xff]
                %345 = vst [vmem:[%s299 + $0xb0] sm:$0xff] %v344
                %v346 = vld [vmem:[%s298 + $0x138] sm:$0xff]
                %347 = vst [vmem:[%s299 + $0xb8] sm:$0xff] %v346
                %v348 = vld [vmem:[%s298 + $0x140] sm:$0xff]
                %349 = vst [vmem:[%s299 + $0xc0] sm:$0xff] %v348
                %v350 = vld [vmem:[%s298 + $0x148] sm:$0xff]
                %351 = vst [vmem:[%s299 + $0xc8] sm:$0xff] %v350
                %v352 = vld [vmem:[%s298 + $0x150] sm:$0xff]
                %353 = vst [vmem:[%s299 + $0xd0] sm:$0xff] %v352
                %v354 = vld [vmem:[%s298 + $0x158] sm:$0xff]
                %355 = vst [vmem:[%s299 + $0xd8] sm:$0xff] %v354
                %v356 = vld [vmem:[%s298 + $0x160] sm:$0xff]
                %357 = vst [vmem:[%s299 + $0xe0] sm:$0xff] %v356
                %v358 = vld [vmem:[%s298 + $0x168] sm:$0xff]
                %359 = vst [vmem:[%s299 + $0xe8] sm:$0xff] %v358
                %v360 = vld [vmem:[%s298 + $0x170] sm:$0xff]
                %361 = vst [vmem:[%s299 + $0xf0] sm:$0xff] %v360
                %v362 = vld [vmem:[%s298 + $0x178] sm:$0xff]
                %363 = vst [vmem:[%s299 + $0xf8] sm:$0xff] %v362
              $region61: #{tpu_custom_call.1} parent=55 // loop_footer
                %s297 = sadd.s32 1, %s293
              $region62: #{tpu_custom_call.1} parent=55 // loop_footer_branch
                %292 = sbr.rel target = $region58
              $region63: #{tpu_custom_call.1} parent=55 // loop_exit
                _
            $region56: #{tpu_custom_call.1} parent=47 // pred_fallthru
              _
          $region48: #{tpu_custom_call.1} parent=43 // pred_fallthru
            _
          %440 = vnop
        $region44: #{tpu_custom_call.1} parent=39 // pred_fallthru
          _
      $region40: #{tpu_custom_call.1} parent=5 // pred_fallthru
        _
      %p441 = scmp.le.s32.totalorder 1, %s17
      %p442 = scmp.lt.s32.totalorder %s17, 3
      %p443 = pnand %p441, %p442
      %p444 = pneg %p443
      // Predicated region
      $region79: #{tpu_custom_call.1} parent=5 // pred_check
        _
      $region80: #{tpu_custom_call.1} parent=5 // pred_check_branch
        %446 = sbr.rel (%p443) target = $region82
      $region81: #{tpu_custom_call.1} parent=5 // pred_region
        %s447 = ssub.s32 %s17, 1
        %s448 = sand.u32 %s44, 1
        %s449 = sand.u32 %s44, 1
        %s450 = smul.addr %s449, 256
        %s451 = scalar_lea.vmem [#allocation3], %s450
        // Predicated region
        $region83: #{tpu_custom_call.1} parent=81 // pred_check
          %p452 = pneg %p57
        $region84: #{tpu_custom_call.1} parent=81 // pred_check_branch
          %454 = sbr.rel (%p452) target = $region86
        $region85: #{tpu_custom_call.1} parent=81 // pred_region
          _
        $region86: #{tpu_custom_call.1} parent=81 // pred_fallthru
          _
        %s455 = sand.u32 %s44, 1
        %s456 = sand.u32 %s44, 1
        %s457 = smul.addr %s456, 256
        %s458 = scalar_lea.vmem [#allocation3], %s457
        %p459 = pneg %p57
        %p460 = pneg %p54
        %p461 = pneg %p78
        %p462 = pneg %p75
        %p463 = pneg %p99
        %p464 = pneg %p96
        %p465 = pneg %p120
        %p466 = pneg %p117
        %p467 = pneg %p141
        %p468 = pneg %p138
        %p469 = pneg %p162
        %p470 = pneg %p159
        %p471 = pneg %p183
        %p472 = pneg %p180
        %p473 = pneg %p209
        %p474 = pneg %p206
        %p475 = pneg %p235
        %p476 = pneg %p232
        %s477 = smul.u32 2, %s26
        %s478 = smul.u32 16, %s27
        %p480 = scmp.eq.s32.totalorder %s27, 0
        // Predicated region
        $region87: #{tpu_custom_call.1} parent=81 // pred_check
          %p481 = pneg %p480
        $region88: #{tpu_custom_call.1} parent=81 // pred_check_branch
          %483 = sbr.rel (%p481) target = $region90
        $region89: #{tpu_custom_call.1} parent=81 // pred_region
          %484 = vst [vmem:[#allocation2] sm:$0x3] 0.0
        $region90: #{tpu_custom_call.1} parent=81 // pred_fallthru
          _
        %v485 = vld [vmem:[%s451] sm:$0xff]
        %v486 = vld [vmem:[%s451 + $0x8] sm:$0xff]
        %v487 = vld [vmem:[%s451 + $0x10] sm:$0xff]
        %v488 = vld [vmem:[%s451 + $0x18] sm:$0xff]
        %v489 = vld [vmem:[%s451 + $0x20] sm:$0xff]
        %v490 = vld [vmem:[%s451 + $0x28] sm:$0xff]
        %v491 = vld [vmem:[%s451 + $0x30] sm:$0xff]
        %v492 = vld [vmem:[%s451 + $0x38] sm:$0xff]
        %v493 = vld [vmem:[%s451 + $0x40] sm:$0xff]
        %v494 = vld [vmem:[%s451 + $0x48] sm:$0xff]
        %v495 = vld [vmem:[%s451 + $0x50] sm:$0xff]
        %v496 = vld [vmem:[%s451 + $0x58] sm:$0xff]
        %v497 = vld [vmem:[%s451 + $0x60] sm:$0xff]
        %v498 = vld [vmem:[%s451 + $0x68] sm:$0xff]
        %v499 = vld [vmem:[%s451 + $0x70] sm:$0xff]
        %v500 = vld [vmem:[%s451 + $0x78] sm:$0xff]
        %v501 = vld [vmem:[%s451 + $0x80] sm:$0xff]
        %v502 = vld [vmem:[%s451 + $0x88] sm:$0xff]
        %v503 = vld [vmem:[%s451 + $0x90] sm:$0xff]
        %v504 = vld [vmem:[%s451 + $0x98] sm:$0xff]
        %v505 = vld [vmem:[%s451 + $0xa0] sm:$0xff]
        %v506 = vld [vmem:[%s451 + $0xa8] sm:$0xff]
        %v507 = vld [vmem:[%s451 + $0xb0] sm:$0xff]
        %v508 = vld [vmem:[%s451 + $0xb8] sm:$0xff]
        %v509 = vld [vmem:[%s451 + $0xc0] sm:$0xff]
        %v510 = vld [vmem:[%s451 + $0xc8] sm:$0xff]
        %v511 = vld [vmem:[%s451 + $0xd0] sm:$0xff]
        %v512 = vld [vmem:[%s451 + $0xd8] sm:$0xff]
        %v513 = vld [vmem:[%s451 + $0xe0] sm:$0xff]
        %v514 = vld [vmem:[%s451 + $0xe8] sm:$0xff]
        %v515 = vld [vmem:[%s451 + $0xf0] sm:$0xff]
        %v516 = vld [vmem:[%s451 + $0xf8] sm:$0xff]
        %v517 = vpack.c.bf16 %v486, %v485
        %v518 = vpack.c.bf16 %v488, %v487
        %v519 = vpack.c.bf16 %v490, %v489
        %v520 = vpack.c.bf16 %v492, %v491
        %v521 = vpack.c.bf16 %v494, %v493
        %v522 = vpack.c.bf16 %v496, %v495
        %v523 = vpack.c.bf16 %v498, %v497
        %v524 = vpack.c.bf16 %v500, %v499
        %v525 = vpack.c.bf16 %v502, %v501
        %v526 = vpack.c.bf16 %v504, %v503
        %v527 = vpack.c.bf16 %v506, %v505
        %v528 = vpack.c.bf16 %v508, %v507
        %v529 = vpack.c.bf16 %v510, %v509
        %v530 = vpack.c.bf16 %v512, %v511
        %v531 = vpack.c.bf16 %v514, %v513
        %v532 = vpack.c.bf16 %v516, %v515
        %v533 = vld [vmem:[%s1] sm:$0x3]
        %v534 = vld [vmem:[%s2] sm:$0x1]
        %v536 = vlaneseq
        %v537 = vshrl.u32 %v536, 7
        %v538 = vsub.s32 0, %v537
        %v539 = vrot.slane %v534, %v538
        %vm541 = vcmask 31744
        %v543 = vsel %vm541, %v517, 0
        %v546 = vsel %vm541, %v518, 0
        %v549 = vsel %vm541, %v519, 0
        %v552 = vsel %vm541, %v520, 0
        %v555 = vsel %vm541, %v521, 0
        %v558 = vsel %vm541, %v522, 0
        %v561 = vsel %vm541, %v523, 0
        %v564 = vsel %vm541, %v524, 0
        %v567 = vsel %vm541, %v525, 0
        %v570 = vsel %vm541, %v526, 0
        %v573 = vsel %vm541, %v527, 0
        %v576 = vsel %vm541, %v528, 0
        %v579 = vsel %vm541, %v529, 0
        %v582 = vsel %vm541, %v530, 0
        %v585 = vsel %vm541, %v531, 0
        %v588 = vsel %vm541, %v532, 0
        %vm590 = vcmask 1041408
        %v592 = vsel %vm590, %v533, 0
        %594 = vmatprep.subr.bf16.mxu0 0
        %595 = vmatpush1.bf16.msra.mxu0 %v592
        %596 = vmatprep.subr.bf16.mxu0 0
        %597 = vmatpush1.bf16.msra.mxu0 0
        %598 = vmatprep.subr.bf16.mxu0 0
        %599 = vmatpush1.bf16.msra.mxu0 0
        %600 = vmatprep.subr.bf16.mxu0 0
        %601 = vmatpush1.bf16.msra.mxu0 0
        %602 = vmatprep.subr.bf16.mxu0 0
        %603 = vmatpush1.bf16.msra.mxu0 0
        %604 = vmatprep.subr.bf16.mxu0 0
        %605 = vmatpush1.bf16.msra.mxu0 0
        %606 = vmatprep.subr.bf16.mxu0 0
        %607 = vmatpush1.bf16.msra.mxu0 0
        %608 = vmatprep.subr.bf16.mxu0 0
        %609 = vmatpush1.bf16.msra.mxu0 0
        %610 = vmatprep.subr.bf16.mxu0 0
        %611 = vmatpush1.bf16.msra.mxu0 0
        %612 = vmatprep.subr.bf16.mxu0 0
        %613 = vmatpush1.bf16.msra.mxu0 0
        %614 = vmatprep.subr.bf16.mxu0 0
        %615 = vmatpush1.bf16.msra.mxu0 0
        %616 = vmatprep.subr.bf16.mxu0 0
        %617 = vmatpush1.bf16.msra.mxu0 0
        %618 = vmatprep.subr.bf16.mxu0 0
        %619 = vmatpush1.bf16.msra.mxu0 0
        %620 = vmatprep.subr.bf16.mxu0 0
        %621 = vmatpush1.bf16.msra.mxu0 0
        %622 = vmatprep.subr.bf16.mxu0 0
        %623 = vmatpush1.bf16.msra.mxu0 0
        %624 = vmatprep.subr.bf16.mxu0 0
        %625 = vmatpush1.bf16.msra.mxu0 0
        %626 = vmatprep.mubr.bf16.mxu0 0
        %627 = vmatmul.mubr.bf16.gmra.mrb[0].mxu0 %v543
        %v628 = vpop.f32.mrb[0].mxu0
        %v629 = vadd.f32 %v539, %v628
        %v630 = vpop.f32.mrb[0].mxu0
        %v631 = vpop.f32.mrb[0].mxu0
        %v632 = vadd.f32 %v539, %v631
        %v633 = vpop.f32.mrb[0].mxu0
        %634 = vmatprep.mubr.bf16.mxu0 0
        %635 = vmatmul.mubr.bf16.gmra.mrb[0].mxu0 %v546
        %v636 = vpop.f32.mrb[0].mxu0
        %v637 = vadd.f32 %v539, %v636
        %v638 = vpop.f32.mrb[0].mxu0
        %v639 = vpop.f32.mrb[0].mxu0
        %v640 = vadd.f32 %v539, %v639
        %v641 = vpop.f32.mrb[0].mxu0
        %642 = vmatprep.mubr.bf16.mxu0 0
        %643 = vmatmul.mubr.bf16.gmra.mrb[0].mxu0 %v549
        %v644 = vpop.f32.mrb[0].mxu0
        %v645 = vadd.f32 %v539, %v644
        %v646 = vpop.f32.mrb[0].mxu0
        %v647 = vpop.f32.mrb[0].mxu0
        %v648 = vadd.f32 %v539, %v647
        %v649 = vpop.f32.mrb[0].mxu0
        %650 = vmatprep.mubr.bf16.mxu0 0
        %651 = vmatmul.mubr.bf16.gmra.mrb[0].mxu0 %v552
        %v652 = vpop.f32.mrb[0].mxu0
        %v653 = vadd.f32 %v539, %v652
        %v654 = vpop.f32.mrb[0].mxu0
        %v655 = vpop.f32.mrb[0].mxu0
        %v656 = vadd.f32 %v539, %v655
        %v657 = vpop.f32.mrb[0].mxu0
        %658 = vmatprep.mubr.bf16.mxu0 0
        %659 = vmatmul.mubr.bf16.gmra.mrb[0].mxu0 %v555
        %v660 = vpop.f32.mrb[0].mxu0
        %v661 = vadd.f32 %v539, %v660
        %v662 = vpop.f32.mrb[0].mxu0
        %v663 = vpop.f32.mrb[0].mxu0
        %v664 = vadd.f32 %v539, %v663
        %v665 = vpop.f32.mrb[0].mxu0
        %666 = vmatprep.mubr.bf16.mxu0 0
        %667 = vmatmul.mubr.bf16.gmra.mrb[0].mxu0 %v558
        %v668 = vpop.f32.mrb[0].mxu0
        %v669 = vadd.f32 %v539, %v668
        %v670 = vpop.f32.mrb[0].mxu0
        %v671 = vpop.f32.mrb[0].mxu0
        %v672 = vadd.f32 %v539, %v671
        %v673 = vpop.f32.mrb[0].mxu0
        %674 = vmatprep.mubr.bf16.mxu0 0
        %675 = vmatmul.mubr.bf16.gmra.mrb[0].mxu0 %v561
        %v676 = vpop.f32.mrb[0].mxu0
        %v677 = vadd.f32 %v539, %v676
        %v678 = vpop.f32.mrb[0].mxu0
        %v679 = vpop.f32.mrb[0].mxu0
        %v680 = vadd.f32 %v539, %v679
        %v681 = vpop.f32.mrb[0].mxu0
        %682 = vmatprep.mubr.bf16.mxu0 0
        %683 = vmatmul.mubr.bf16.gmra.mrb[0].mxu0 %v564
        %v684 = vpop.f32.mrb[0].mxu0
        %v685 = vadd.f32 %v539, %v684
        %v686 = vpop.f32.mrb[0].mxu0
        %v687 = vpop.f32.mrb[0].mxu0
        %v688 = vadd.f32 %v539, %v687
        %v689 = vpop.f32.mrb[0].mxu0
        %690 = vmatprep.mubr.bf16.mxu0 0
        %691 = vmatmul.mubr.bf16.gmra.mrb[0].mxu0 %v567
        %v692 = vpop.f32.mrb[0].mxu0
        %v693 = vadd.f32 %v539, %v692
        %v694 = vpop.f32.mrb[0].mxu0
        %v695 = vpop.f32.mrb[0].mxu0
        %v696 = vadd.f32 %v539, %v695
        %v697 = vpop.f32.mrb[0].mxu0
        %698 = vmatprep.mubr.bf16.mxu0 0
        %699 = vmatmul.mubr.bf16.gmra.mrb[0].mxu0 %v570
        %v700 = vpop.f32.mrb[0].mxu0
        %v701 = vadd.f32 %v539, %v700
        %v702 = vpop.f32.mrb[0].mxu0
        %v703 = vpop.f32.mrb[0].mxu0
        %v704 = vadd.f32 %v539, %v703
        %v705 = vpop.f32.mrb[0].mxu0
        %706 = vmatprep.mubr.bf16.mxu0 0
        %707 = vmatmul.mubr.bf16.gmra.mrb[0].mxu0 %v573
        %v708 = vpop.f32.mrb[0].mxu0
        %v709 = vadd.f32 %v539, %v708
        %v710 = vpop.f32.mrb[0].mxu0
        %v711 = vpop.f32.mrb[0].mxu0
        %v712 = vadd.f32 %v539, %v711
        %v713 = vpop.f32.mrb[0].mxu0
        %714 = vmatprep.mubr.bf16.mxu0 0
        %715 = vmatmul.mubr.bf16.gmra.mrb[0].mxu0 %v576
        %v716 = vpop.f32.mrb[0].mxu0
        %v717 = vadd.f32 %v539, %v716
        %v718 = vpop.f32.mrb[0].mxu0
        %v719 = vpop.f32.mrb[0].mxu0
        %v720 = vadd.f32 %v539, %v719
        %v721 = vpop.f32.mrb[0].mxu0
        %722 = vmatprep.mubr.bf16.mxu0 0
        %723 = vmatmul.mubr.bf16.gmra.mrb[0].mxu0 %v579
        %v724 = vpop.f32.mrb[0].mxu0
        %v725 = vadd.f32 %v539, %v724
        %v726 = vpop.f32.mrb[0].mxu0
        %v727 = vpop.f32.mrb[0].mxu0
        %v728 = vadd.f32 %v539, %v727
        %v729 = vpop.f32.mrb[0].mxu0
        %730 = vmatprep.mubr.bf16.mxu0 0
        %731 = vmatmul.mubr.bf16.gmra.mrb[0].mxu0 %v582
        %v732 = vpop.f32.mrb[0].mxu0
        %v733 = vadd.f32 %v539, %v732
        %v734 = vpop.f32.mrb[0].mxu0
        %v735 = vpop.f32.mrb[0].mxu0
        %v736 = vadd.f32 %v539, %v735
        %v737 = vpop.f32.mrb[0].mxu0
        %738 = vmatprep.mubr.bf16.mxu0 0
        %739 = vmatmul.mubr.bf16.gmra.mrb[0].mxu0 %v585
        %v740 = vpop.f32.mrb[0].mxu0
        %v741 = vadd.f32 %v539, %v740
        %v742 = vpop.f32.mrb[0].mxu0
        %v743 = vpop.f32.mrb[0].mxu0
        %v744 = vadd.f32 %v539, %v743
        %v745 = vpop.f32.mrb[0].mxu0
        %746 = vmatprep.mubr.bf16.mxu0 0
        %747 = vmatmul.mubr.bf16.gmra.mrb[0].mxu0 %v588
        %v748 = vpop.f32.mrb[0].mxu0
        %v749 = vadd.f32 %v539, %v748
        %v750 = vpop.f32.mrb[0].mxu0
        %v751 = vpop.f32.mrb[0].mxu0
        %v752 = vadd.f32 %v539, %v751
        %v753 = vpop.f32.mrb[0].mxu0
        %754 = vdwg.mxu0
        %v755 = vmax.f32 %v629, 1e-06
        %v756 = vmax.f32 %v632, 1e-06
        %v757 = vmax.f32 %v637, 1e-06
        %v758 = vmax.f32 %v640, 1e-06
        %v759 = vmax.f32 %v645, 1e-06
        %v760 = vmax.f32 %v648, 1e-06
        %v761 = vmax.f32 %v653, 1e-06
        %v762 = vmax.f32 %v656, 1e-06
        %v763 = vmax.f32 %v661, 1e-06
        %v764 = vmax.f32 %v664, 1e-06
        %v765 = vmax.f32 %v669, 1e-06
        %v766 = vmax.f32 %v672, 1e-06
        %v767 = vmax.f32 %v677, 1e-06
        %v768 = vmax.f32 %v680, 1e-06
        %v769 = vmax.f32 %v685, 1e-06
        %v770 = vmax.f32 %v688, 1e-06
        %v771 = vmax.f32 %v693, 1e-06
        %v772 = vmax.f32 %v696, 1e-06
        %v773 = vmax.f32 %v701, 1e-06
        %v774 = vmax.f32 %v704, 1e-06
        %v775 = vmax.f32 %v709, 1e-06
        %v776 = vmax.f32 %v712, 1e-06
        %v777 = vmax.f32 %v717, 1e-06
        %v778 = vmax.f32 %v720, 1e-06
        %v779 = vmax.f32 %v725, 1e-06
        %v780 = vmax.f32 %v728, 1e-06
        %v781 = vmax.f32 %v733, 1e-06
        %v782 = vmax.f32 %v736, 1e-06
        %v783 = vmax.f32 %v741, 1e-06
        %v784 = vmax.f32 %v744, 1e-06
        %v785 = vmax.f32 %v749, 1e-06
        %v786 = vmax.f32 %v752, 1e-06
        %v787 = vmul.f32 %v755, %v755
        %v788 = vmul.f32 %v756, %v756
        %v789 = vmul.f32 %v757, %v757
        %v790 = vmul.f32 %v758, %v758
        %v791 = vmul.f32 %v759, %v759
        %v792 = vmul.f32 %v760, %v760
        %v793 = vmul.f32 %v761, %v761
        %v794 = vmul.f32 %v762, %v762
        %v795 = vmul.f32 %v763, %v763
        %v796 = vmul.f32 %v764, %v764
        %v797 = vmul.f32 %v765, %v765
        %v798 = vmul.f32 %v766, %v766
        %v799 = vmul.f32 %v767, %v767
        %v800 = vmul.f32 %v768, %v768
        %v801 = vmul.f32 %v769, %v769
        %v802 = vmul.f32 %v770, %v770
        %v803 = vmul.f32 %v771, %v771
        %v804 = vmul.f32 %v772, %v772
        %v805 = vmul.f32 %v773, %v773
        %v806 = vmul.f32 %v774, %v774
        %v807 = vmul.f32 %v775, %v775
        %v808 = vmul.f32 %v776, %v776
        %v809 = vmul.f32 %v777, %v777
        %v810 = vmul.f32 %v778, %v778
        %v811 = vmul.f32 %v779, %v779
        %v812 = vmul.f32 %v780, %v780
        %v813 = vmul.f32 %v781, %v781
        %v814 = vmul.f32 %v782, %v782
        %v815 = vmul.f32 %v783, %v783
        %v816 = vmul.f32 %v784, %v784
        %v817 = vmul.f32 %v785, %v785
        %v818 = vmul.f32 %v786, %v786
        %v819 = vmul.f32 %v787, %v755
        %v820 = vmul.f32 %v788, %v756
        %v821 = vmul.f32 %v789, %v757
        %v822 = vmul.f32 %v790, %v758
        %v823 = vmul.f32 %v791, %v759
        %v824 = vmul.f32 %v792, %v760
        %v825 = vmul.f32 %v793, %v761
        %v826 = vmul.f32 %v794, %v762
        %v827 = vmul.f32 %v795, %v763
        %v828 = vmul.f32 %v796, %v764
        %v829 = vmul.f32 %v797, %v765
        %v830 = vmul.f32 %v798, %v766
        %v831 = vmul.f32 %v799, %v767
        %v832 = vmul.f32 %v800, %v768
        %v833 = vmul.f32 %v801, %v769
        %v834 = vmul.f32 %v802, %v770
        %v835 = vmul.f32 %v803, %v771
        %v836 = vmul.f32 %v804, %v772
        %v837 = vmul.f32 %v805, %v773
        %v838 = vmul.f32 %v806, %v774
        %v839 = vmul.f32 %v807, %v775
        %v840 = vmul.f32 %v808, %v776
        %v841 = vmul.f32 %v809, %v777
        %v842 = vmul.f32 %v810, %v778
        %v843 = vmul.f32 %v811, %v779
        %v844 = vmul.f32 %v812, %v780
        %v845 = vmul.f32 %v813, %v781
        %v846 = vmul.f32 %v814, %v782
        %v847 = vmul.f32 %v815, %v783
        %v848 = vmul.f32 %v816, %v784
        %v849 = vmul.f32 %v817, %v785
        %v850 = vmul.f32 %v818, %v786
        %v851 = vld [vmem:[#allocation2] sm:$0x3]
        %v852 = vadd.f32 %v819, %v820
        %v853 = vadd.f32 %v852, %v821
        %v854 = vadd.f32 %v853, %v822
        %v855 = vadd.f32 %v854, %v823
        %v856 = vadd.f32 %v855, %v824
        %v857 = vadd.f32 %v856, %v825
        %v858 = vadd.f32 %v857, %v826
        %v859 = vadd.f32 %v858, %v827
        %v860 = vadd.f32 %v859, %v828
        %v861 = vadd.f32 %v860, %v829
        %v862 = vadd.f32 %v861, %v830
        %v863 = vadd.f32 %v862, %v831
        %v864 = vadd.f32 %v863, %v832
        %v865 = vadd.f32 %v864, %v833
        %v866 = vadd.f32 %v865, %v834
        %v867 = vrot.slane %v866, 4
        %v868 = vadd.f32 %v866, %v867
        %v869 = vrot.slane %v868, 2
        %v870 = vadd.f32 %v868, %v869
        %v871 = vrot.slane %v870, 1
        %v872 = vadd.f32 %v870, %v871
        %v873 = vadd.f32 %v835, %v836
        %v874 = vadd.f32 %v873, %v837
        %v875 = vadd.f32 %v874, %v838
        %v876 = vadd.f32 %v875, %v839
        %v877 = vadd.f32 %v876, %v840
        %v878 = vadd.f32 %v877, %v841
        %v879 = vadd.f32 %v878, %v842
        %v880 = vadd.f32 %v879, %v843
        %v881 = vadd.f32 %v880, %v844
        %v882 = vadd.f32 %v881, %v845
        %v883 = vadd.f32 %v882, %v846
        %v884 = vadd.f32 %v883, %v847
        %v885 = vadd.f32 %v884, %v848
        %v886 = vadd.f32 %v885, %v849
        %v887 = vadd.f32 %v886, %v850
        %v888 = vrot.slane %v887, 4
        %v889 = vadd.f32 %v887, %v888
        %v890 = vrot.slane %v889, 2
        %v891 = vadd.f32 %v889, %v890
        %v892 = vrot.slane %v891, 1
        %v893 = vadd.f32 %v891, %v892
        %vm896 = vcmask 1041409
        %v897 = vsel %vm896, %v893, %v872
        %v899 = vadd.f32 %v851, %v897
        %900 = vst [vmem:[#allocation2] sm:$0x3] %v899
        %p901 = scmp.eq.s32.totalorder %s27, 1
        // Predicated region
        $region91: #{tpu_custom_call.1} parent=81 // pred_check
          %p902 = pneg %p901
        $region92: #{tpu_custom_call.1} parent=81 // pred_check_branch
          %904 = sbr.rel (%p902) target = $region94
        $region93: #{tpu_custom_call.1} parent=81 // pred_region
          %v905 = vld [vmem:[#allocation2] sm:$0x3]
          %v906 = vmul.f32 %v905, 0.00390625
          %v907 = vlog2.pop %v906
          %v908 = vmul.f32 %v907, 0.6931472
          %v909 = vmul.f32 %v908, 0.33333334
          %v910 = vmul.f32 %v909, 1.442695
          %v911 = vpow.pop %v910
          %v912 = vpack.c.bf16 %v911, %v911
          %v913 = vld [vmem:[%s3] sm:$0xff]
          %v914 = vld [vmem:[%s3 + $0x8] sm:$0xff]
          %v915 = vld [vmem:[%s3 + $0x10] sm:$0xff]
          %v916 = vld [vmem:[%s3 + $0x18] sm:$0xff]
          %v917 = vld [vmem:[%s3 + $0x20] sm:$0xff]
          %v918 = vld [vmem:[%s3 + $0x28] sm:$0xff]
          %v919 = vld [vmem:[%s3 + $0x30] sm:$0xff]
          %v920 = vld [vmem:[%s3 + $0x38] sm:$0xff]
          %v921 = vld [vmem:[%s3 + $0x40] sm:$0xff]
          %v922 = vld [vmem:[%s3 + $0x48] sm:$0xff]
          %v923 = vld [vmem:[%s3 + $0x50] sm:$0xff]
          %v924 = vld [vmem:[%s3 + $0x58] sm:$0xff]
          %v925 = vld [vmem:[%s3 + $0x60] sm:$0xff]
          %v926 = vld [vmem:[%s3 + $0x68] sm:$0xff]
          %v927 = vld [vmem:[%s3 + $0x70] sm:$0xff]
          %v928 = vld [vmem:[%s3 + $0x78] sm:$0xff]
          %v929 = vld [vmem:[%s4] sm:$0x3]
          %v931 = vlaneseq
          %v932 = vshrl.u32 %v931, 7
          %v933 = vsub.s32 0, %v932
          %v934 = vrot.slane %v929, %v933
          %v935 = vlaneseq
          %v936 = vshrl.u32 %v935, 7
          %v937 = vsub.s32 1, %v936
          %v938 = vrot.slane %v929, %v937
          %v957 = vunpack.c.l.b16 %v913
          %v958 = vunpack.c.h.b16 %v913
          %v959 = vunpack.c.l.b16 %v914
          %v960 = vunpack.c.h.b16 %v914
          %v961 = vunpack.c.l.b16 %v915
          %v962 = vunpack.c.h.b16 %v915
          %v963 = vunpack.c.l.b16 %v916
          %v964 = vunpack.c.h.b16 %v916
          %v965 = vunpack.c.l.b16 %v917
          %v966 = vunpack.c.h.b16 %v917
          %v967 = vunpack.c.l.b16 %v918
          %v968 = vunpack.c.h.b16 %v918
          %v969 = vunpack.c.l.b16 %v919
          %v970 = vunpack.c.h.b16 %v919
          %v971 = vunpack.c.l.b16 %v920
          %v972 = vunpack.c.h.b16 %v920
          %v973 = vunpack.c.l.b16 %v921
          %v974 = vunpack.c.h.b16 %v921
          %v975 = vunpack.c.l.b16 %v922
          %v976 = vunpack.c.h.b16 %v922
          %v977 = vunpack.c.l.b16 %v923
          %v978 = vunpack.c.h.b16 %v923
          %v979 = vunpack.c.l.b16 %v924
          %v980 = vunpack.c.h.b16 %v924
          %v981 = vunpack.c.l.b16 %v925
          %v982 = vunpack.c.h.b16 %v925
          %v983 = vunpack.c.l.b16 %v926
          %v984 = vunpack.c.h.b16 %v926
          %v985 = vunpack.c.l.b16 %v927
          %v986 = vunpack.c.h.b16 %v927
          %v987 = vunpack.c.l.b16 %v928
          %v988 = vunpack.c.h.b16 %v928
          %v989 = vpack.c.b16 %v959, %v957
          %v990 = vpack.c.b16 %v960, %v958
          %v991 = vpack.c.b16 %v963, %v961
          %v992 = vpack.c.b16 %v964, %v962
          %v993 = vpack.c.b16 %v967, %v965
          %v994 = vpack.c.b16 %v968, %v966
          %v995 = vpack.c.b16 %v971, %v969
          %v996 = vpack.c.b16 %v972, %v970
          %v997 = vpack.c.b16 %v975, %v973
          %v998 = vpack.c.b16 %v976, %v974
          %v999 = vpack.c.b16 %v979, %v977
          %v1000 = vpack.c.b16 %v980, %v978
          %v1001 = vpack.c.b16 %v983, %v981
          %v1002 = vpack.c.b16 %v984, %v982
          %v1003 = vpack.c.b16 %v987, %v985
          %v1004 = vpack.c.b16 %v988, %v986
          %1021 = vmatprep.subr.bf16.mxu0 %v990
          %1022 = vmatpush1.bf16.msra.mxu0 %v989
          %1023 = vmatprep.subr.bf16.mxu0 %v992
          %1024 = vmatpush1.bf16.msra.mxu0 %v991
          %1025 = vmatprep.subr.bf16.mxu0 %v994
          %1026 = vmatpush1.bf16.msra.mxu0 %v993
          %1027 = vmatprep.subr.bf16.mxu0 %v996
          %1028 = vmatpush1.bf16.msra.mxu0 %v995
          %1029 = vmatprep.subr.bf16.mxu0 %v998
          %1030 = vmatpush1.bf16.msra.mxu0 %v997
          %1031 = vmatprep.subr.bf16.mxu0 %v1000
          %1032 = vmatpush1.bf16.msra.mxu0 %v999
          %1033 = vmatprep.subr.bf16.mxu0 %v1002
          %1034 = vmatpush1.bf16.msra.mxu0 %v1001
          %1035 = vmatprep.subr.bf16.mxu0 %v1004
          %1036 = vmatpush1.bf16.msra.mxu0 %v1003
          %1037 = vmatprep.subr.bf16.mxu0 0
          %1038 = vmatpush1.bf16.msra.mxu0 0
          %1039 = vmatprep.subr.bf16.mxu0 0
          %1040 = vmatpush1.bf16.msra.mxu0 0
          %1041 = vmatprep.subr.bf16.mxu0 0
          %1042 = vmatpush1.bf16.msra.mxu0 0
          %1043 = vmatprep.subr.bf16.mxu0 0
          %1044 = vmatpush1.bf16.msra.mxu0 0
          %1045 = vmatprep.subr.bf16.mxu0 0
          %1046 = vmatpush1.bf16.msra.mxu0 0
          %1047 = vmatprep.subr.bf16.mxu0 0
          %1048 = vmatpush1.bf16.msra.mxu0 0
          %1049 = vmatprep.subr.bf16.mxu0 0
          %1050 = vmatpush1.bf16.msra.mxu0 0
          %1051 = vmatprep.subr.bf16.mxu0 0
          %1052 = vmatpush1.bf16.msra.mxu0 0
          %1053 = vmatprep.mubr.bf16.mxu0 0
          %1054 = vmatmul.mubr.bf16.gmra.mrb[0].mxu0 %v912
          %v1055 = vpop.f32.mrb[0].mxu0
          %v1056 = vadd.f32 %v934, %v1055
          %v1057 = vpop.f32.mrb[0].mxu0
          %v1058 = vadd.f32 %v938, %v1057
          %v1059 = vpop.f32.mrb[0].mxu0
          %v1060 = vpop.f32.mrb[0].mxu0
          %1061 = vdwg.mxu0
          %1062 = vst [vmem:[#allocation6] sm:$0x3] %v1058
          %v1063 = vmul.f32 %v1056, %v1056
          %v1064 = vsel %vm590, %v1063, 0.0
          %1065 = vadd.xlane.f32.xlu0 %v1064
          %v1066 = vpop.xlane.xlu0 %1065
          %v1067 = vmax.f32 %v1066, 1e-24
          %v1068 = vrsqrt.pop %v1067
          %v1069 = vmul.f32 %v1056, %v1068
          %v1070 = vpack.c.bf16 %v1069, %v1069
          %v1071 = vld [vmem:[%s5] sm:$0xf]
          %v1072 = vld [vmem:[%s5 + $0x4] sm:$0xf]
          %v1073 = vld [vmem:[%s5 + $0x8] sm:$0xf]
          %v1074 = vld [vmem:[%s5 + $0xc] sm:$0xf]
          %v1075 = vld [vmem:[%s5 + $0x10] sm:$0xf]
          %v1076 = vld [vmem:[%s5 + $0x14] sm:$0xf]
          %v1077 = vld [vmem:[%s5 + $0x18] sm:$0xf]
          %v1078 = vld [vmem:[%s5 + $0x1c] sm:$0xf]
          %v1079 = vld [vmem:[%s5 + $0x20] sm:$0xf]
          %v1080 = vld [vmem:[%s5 + $0x24] sm:$0xf]
          %v1081 = vld [vmem:[%s5 + $0x28] sm:$0xf]
          %v1082 = vld [vmem:[%s5 + $0x2c] sm:$0xf]
          %v1083 = vld [vmem:[%s5 + $0x30] sm:$0xf]
          %v1084 = vld [vmem:[%s5 + $0x34] sm:$0xf]
          %v1085 = vld [vmem:[%s5 + $0x38] sm:$0xf]
          %v1086 = vld [vmem:[%s5 + $0x3c] sm:$0xf]
          %v1087 = vld [vmem:[%s6] sm:$0x1]
          %v1089 = vlaneseq
          %v1090 = vshrl.u32 %v1089, 7
          %v1091 = vsub.s32 0, %v1090
          %v1092 = vrot.slane %v1087, %v1091
          %v1110 = vunpack.c.l.b16 %v1071
          %v1111 = vunpack.c.l.b16 %v1072
          %v1112 = vunpack.c.l.b16 %v1073
          %v1113 = vunpack.c.l.b16 %v1074
          %v1114 = vunpack.c.l.b16 %v1075
          %v1115 = vunpack.c.l.b16 %v1076
          %v1116 = vunpack.c.l.b16 %v1077
          %v1117 = vunpack.c.l.b16 %v1078
          %v1118 = vunpack.c.l.b16 %v1079
          %v1119 = vunpack.c.l.b16 %v1080
          %v1120 = vunpack.c.l.b16 %v1081
          %v1121 = vunpack.c.l.b16 %v1082
          %v1122 = vunpack.c.l.b16 %v1083
          %v1123 = vunpack.c.l.b16 %v1084
          %v1124 = vunpack.c.l.b16 %v1085
          %v1125 = vunpack.c.l.b16 %v1086
          %v1126 = vpack.c.b16 %v1111, %v1110
          %v1127 = vpack.c.b16 %v1113, %v1112
          %v1128 = vpack.c.b16 %v1115, %v1114
          %v1129 = vpack.c.b16 %v1117, %v1116
          %v1130 = vpack.c.b16 %v1119, %v1118
          %v1131 = vpack.c.b16 %v1121, %v1120
          %v1132 = vpack.c.b16 %v1123, %v1122
          %v1133 = vpack.c.b16 %v1125, %v1124
          %1142 = vmatprep.subr.bf16.mxu0 0
          %1143 = vmatpush1.bf16.msra.mxu0 %v1126
          %1144 = vmatprep.subr.bf16.mxu0 0
          %1145 = vmatpush1.bf16.msra.mxu0 %v1127
          %1146 = vmatprep.subr.bf16.mxu0 0
          %1147 = vmatpush1.bf16.msra.mxu0 %v1128
          %1148 = vmatprep.subr.bf16.mxu0 0
          %1149 = vmatpush1.bf16.msra.mxu0 %v1129
          %1150 = vmatprep.subr.bf16.mxu0 0
          %1151 = vmatpush1.bf16.msra.mxu0 %v1130
          %1152 = vmatprep.subr.bf16.mxu0 0
          %1153 = vmatpush1.bf16.msra.mxu0 %v1131
          %1154 = vmatprep.subr.bf16.mxu0 0
          %1155 = vmatpush1.bf16.msra.mxu0 %v1132
          %1156 = vmatprep.subr.bf16.mxu0 0
          %1157 = vmatpush1.bf16.msra.mxu0 %v1133
          %1158 = vmatprep.subr.bf16.mxu0 0
          %1159 = vmatpush1.bf16.msra.mxu0 0
          %1160 = vmatprep.subr.bf16.mxu0 0
          %1161 = vmatpush1.bf16.msra.mxu0 0
          %1162 = vmatprep.subr.bf16.mxu0 0
          %1163 = vmatpush1.bf16.msra.mxu0 0
          %1164 = vmatprep.subr.bf16.mxu0 0
          %1165 = vmatpush1.bf16.msra.mxu0 0
          %1166 = vmatprep.subr.bf16.mxu0 0
          %1167 = vmatpush1.bf16.msra.mxu0 0
          %1168 = vmatprep.subr.bf16.mxu0 0
          %1169 = vmatpush1.bf16.msra.mxu0 0
          %1170 = vmatprep.subr.bf16.mxu0 0
          %1171 = vmatpush1.bf16.msra.mxu0 0
          %1172 = vmatprep.subr.bf16.mxu0 0
          %1173 = vmatpush1.bf16.msra.mxu0 0
          %1174 = vmatprep.mubr.bf16.mxu0 0
          %1175 = vmatmul.mubr.bf16.gmra.mrb[0].mxu0 %v1070
          %v1176 = vpop.f32.mrb[0].mxu0
          %v1177 = vadd.f32 %v1092, %v1176
          %v1178 = vpop.f32.mrb[0].mxu0
          %v1179 = vpop.f32.mrb[0].mxu0
          %v1180 = vpop.f32.mrb[0].mxu0
          %1181 = vdwg.mxu0
          %1182 = vst [vmem:[#allocation4] sm:$0x3] %v1177
        $region94: #{tpu_custom_call.1} parent=81 // pred_fallthru
          _
        // Predicated region
        $region95: #{tpu_custom_call.1} parent=81 // pred_check
          %p1183 = pneg %p206
        $region96: #{tpu_custom_call.1} parent=81 // pred_check_branch
          %1185 = sbr.rel (%p1183) target = $region98
        $region97: #{tpu_custom_call.1} parent=81 // pred_region
          %s1187 = ssub.s32 32, 32
          %1188 = vsyncadd [#allocation5], %s1187
          %s1189 = smul.addr %s26, 32
          %s1190 = scalar_lea.hbm %s7, %s1189
          %s1192 = sshll.u32 [#allocation4], 4
          %s1193 = int_to_ptr.vmem [resolvable:$true] %s1192
          %1195 = dma.vmem_to_hbm [thread:$0]  %s1193, 32, %s1190, [#allocation5]
        $region98: #{tpu_custom_call.1} parent=81 // pred_fallthru
          _
        // Predicated region
        $region99: #{tpu_custom_call.1} parent=81 // pred_check
          %p1196 = pneg %p232
        $region100: #{tpu_custom_call.1} parent=81 // pred_check_branch
          %1198 = sbr.rel (%p1196) target = $region102
        $region101: #{tpu_custom_call.1} parent=81 // pred_region
          %s1200 = ssub.s32 32, 32
          %1201 = vsyncadd [#allocation7], %s1200
          %s1202 = smul.addr %s26, 32
          %s1203 = scalar_lea.hbm %s8, %s1202
          %s1205 = sshll.u32 [#allocation6], 4
          %s1206 = int_to_ptr.vmem [resolvable:$true] %s1205
          %1208 = dma.vmem_to_hbm [thread:$0]  %s1206, 32, %s1203, [#allocation7]
        $region102: #{tpu_custom_call.1} parent=81 // pred_fallthru
          _
        // Predicated region
        $region103: #{tpu_custom_call.1} parent=81 // pred_check
          %p1209 = pneg %p206
        $region104: #{tpu_custom_call.1} parent=81 // pred_check_branch
          %1211 = sbr.rel (%p1209) target = $region106
        $region105: #{tpu_custom_call.1} parent=81 // pred_region
          %1212 = dma.done [#allocation5], 32
        $region106: #{tpu_custom_call.1} parent=81 // pred_fallthru
          _
        // Predicated region
        $region107: #{tpu_custom_call.1} parent=81 // pred_check
          %p1213 = pneg %p232
        $region108: #{tpu_custom_call.1} parent=81 // pred_check_branch
          %1215 = sbr.rel (%p1213) target = $region110
        $region109: #{tpu_custom_call.1} parent=81 // pred_region
          %1216 = dma.done [#allocation7], 32
        $region110: #{tpu_custom_call.1} parent=81 // pred_fallthru
          _
      $region82: #{tpu_custom_call.1} parent=5 // pred_fallthru
        _
      %p1217 = scmp.le.s32.totalorder 2, %s17
      // Predicated region
      $region111: #{tpu_custom_call.1} parent=5 // pred_check
        %p1218 = pneg %p1217
      $region112: #{tpu_custom_call.1} parent=5 // pred_check_branch
        %1220 = sbr.rel (%p1218) target = $region114
      $region113: #{tpu_custom_call.1} parent=5 // pred_region
        %s1221 = ssub.s32 %s17, 2
      $region114: #{tpu_custom_call.1} parent=5 // pred_fallthru
        _
    $region6: #{tpu_custom_call.1} parent=1 // loop_footer
      %s21 = sadd.s32 1, %s17
    $region7: #{tpu_custom_call.1} parent=1 // loop_footer_branch
      %16 = sbr.rel target = $region3
    $region8: #{tpu_custom_call.1} parent=1 // loop_exit
      _
    %1222 = vsyncpa [#allocation5], 1
    %s1223 = scalar_lea.sflag [#allocation5], 1
    %1224 = vsyncpa %s1223, 1
    %1225 = vsyncpa [#allocation7], 1

</llo_original>
